<compile_context>
chip_gen: v5e
topology: v5e:2x2
jax: 0.10.0
libtpu: 0.0.40
codegen_flags: <defaults>
</compile_context>

<pallas_src>
import functools

import jax
import jax.numpy as jnp
from jax.experimental import pallas as pl
from jax.experimental.pallas import tpu as pltpu


_PAD_N = 256                       # node-count padding granularity (not tile size)
_XW_RESIDENT_BYTES = 6 * 1024 * 1024   # keep XW VMEM-resident up to this size


@functools.lru_cache(maxsize=1)
def _vmem_limit_bytes():
    """~75% of physical VMEM: ~48 MiB on v7x, 96 MiB on v5e/v6e; 32 MiB fallback."""
    try:
        cap = int(pltpu.get_tpu_info().vmem_capacity_bytes)
    except Exception:
        cap = 64 * 1024 * 1024
    return max(32 * 1024 * 1024, min(3 * cap // 4, 96 * 1024 * 1024))


def _round_up(v, m):
    return ((v + m - 1) // m) * m


def _pad2(x, rows, cols):
    return jnp.pad(x, ((0, rows - x.shape[0]), (0, cols - x.shape[1])))


def _choose_tiles(n_pad):
    """Pick (tile_m, tile_k) dividing n_pad; large K tile, >=2 row tiles if possible."""
    def pick(pred):
        for t in (1024, 512, 256):
            if n_pad % t == 0 and pred(t):
                return t
        return None

    tile_k = pick(lambda t: True) or n_pad
    # Prefer the largest row tile that still yields >= 2 row blocks (v7x dual TC);
    # fall back to a single full-size block for tiny graphs.
    tile_m = pick(lambda t: n_pad // t >= 2)
    if tile_m is None:
        tile_m = pick(lambda t: True) or n_pad
    return tile_m, tile_k


# ---------------------------------------------------------------------------
# Kernels
# ---------------------------------------------------------------------------
def _xw_kernel(x_ref, w_ref, out_ref):
    """Row-tiled feature transform: out[i] = X[i] @ W (bf16 out, f32 accum)."""
    out_ref[...] = jnp.dot(
        x_ref[...], w_ref[...], preferred_element_type=jnp.float32
    ).astype(out_ref.dtype)


def _make_aggregate_kernel(tile_k, xw_resident, fuse_next_w):
    """H[i] = relu(sum_k A[i,k] @ XW[k] + b); optionally fused '@ W_next' epilogue."""

    def kernel(*refs):
        if fuse_next_w:
            a_ref, xw_ref, b_ref, w_next_ref, out_ref, acc_ref = refs
        else:
            a_ref, xw_ref, b_ref, out_ref, acc_ref = refs
        k = pl.program_id(1)

        @pl.when(k == 0)
        def _():
            acc_ref[...] = jnp.zeros_like(acc_ref)

        if xw_resident:
            start = pl.multiple_of(k * tile_k, tile_k)
            xw = xw_ref[pl.ds(start, tile_k), :]
        else:
            xw = xw_ref[...]
        acc_ref[...] += jnp.dot(a_ref[...], xw, preferred_element_type=jnp.float32)

        @pl.when(k == pl.num_programs(1) - 1)
        def _():
            h = jnp.maximum(acc_ref[...] + b_ref[...], 0.0)
            if fuse_next_w:
                out_ref[...] = jnp.dot(
                    h.astype(jnp.bfloat16), w_next_ref[...],
                    preferred_element_type=jnp.float32,
                ).astype(out_ref.dtype)
            else:
                out_ref[...] = h.astype(out_ref.dtype)

    return kernel


def _pool_fc_kernel(p_ref, h_ref, wfc_ref, bfc_ref, out_ref, acc_ref):
    """out = (sum_k P[:,k] @ H[k]) @ Wfc + bfc; fc applied on last K step."""
    k = pl.program_id(0)

    @pl.when(k == 0)
    def _():
        acc_ref[...] = jnp.zeros_like(acc_ref)

    acc_ref[...] += jnp.dot(
        p_ref[...], h_ref[...].astype(jnp.float32),
        preferred_element_type=jnp.float32,
    )

    @pl.when(k == pl.num_programs(0) - 1)
    def _():
        out_ref[...] = (
            jnp.dot(acc_ref[...], wfc_ref[...], preferred_element_type=jnp.float32)
            + bfc_ref[...]
        )


# ---------------------------------------------------------------------------
# pallas_call wrappers
# ---------------------------------------------------------------------------
def _xw(x_bf, w_bf, *, tile_m):
    n_pad, f_pad = x_bf.shape
    h_pad = w_bf.shape[1]
    num_row = n_pad // tile_m
    return pl.pallas_call(
        _xw_kernel,
        out_shape=jax.ShapeDtypeStruct((n_pad, h_pad), jnp.bfloat16),
        grid_spec=pltpu.PrefetchScalarGridSpec(
            num_scalar_prefetch=0,
            grid=(num_row,),
            in_specs=[
                pl.BlockSpec((tile_m, f_pad), lambda i: (i, 0)),
                pl.BlockSpec((f_pad, h_pad), lambda i: (0, 0)),
            ],
            out_specs=pl.BlockSpec((tile_m, h_pad), lambda i: (i, 0)),
        ),
        compiler_params=pltpu.CompilerParams(
            dimension_semantics=("parallel",),
            vmem_limit_bytes=_vmem_limit_bytes(),
        ),
    )(x_bf, w_bf)


def _gcn_aggregate(a_bf, xw_bf, b_f32, *, tile_m, tile_k, w_next_bf=None):
    """relu(A_hat @ XW + b) [optionally immediately @ W_next], tiled over (row, K)."""
    n_pad = a_bf.shape[0]
    h_in = xw_bf.shape[1]
    h_out = w_next_bf.shape[1] if w_next_bf is not None else h_in
    num_row = n_pad // tile_m
    num_k = n_pad // tile_k
    fuse = w_next_bf is not None

    # Keep XW resident in VMEM (DMA'd once) unless the graph is very large.
    xw_resident = (n_pad * h_in * 2) <= _XW_RESIDENT_BYTES
    if xw_resident:
        xw_spec = pl.BlockSpec((n_pad, h_in), lambda i, k: (0, 0))
    else:
        xw_spec = pl.BlockSpec((tile_k, h_in), lambda i, k: (k, 0))

    in_specs = [
        pl.BlockSpec((tile_m, tile_k), lambda i, k: (i, k)),   # A_hat stream
        xw_spec,
        pl.BlockSpec((1, h_in), lambda i, k: (0, 0)),           # bias
    ]
    args = [a_bf, xw_bf, b_f32]
    if fuse:
        in_specs.append(pl.BlockSpec((h_in, h_out), lambda i, k: (0, 0)))
        args.append(w_next_bf)

    flops = 2 * n_pad * n_pad * h_in + (2 * n_pad * h_in * h_out if fuse else 0)
    bytes_accessed = (
        2 * n_pad * n_pad                                        # A_hat (bf16)
        + (1 if xw_resident else num_row) * n_pad * h_in * 2     # XW reads
        + n_pad * h_out * 2                                      # output write
        + h_in * h_out * 2 + 4 * h_in                            # weights/bias
    )

    return pl.pallas_call(
        _make_aggregate_kernel(tile_k, xw_resident, fuse),
        out_shape=jax.ShapeDtypeStruct((n_pad, h_out), jnp.bfloat16),
        grid_spec=pltpu.PrefetchScalarGridSpec(
            num_scalar_prefetch=0,
            grid=(num_row, num_k),
            in_specs=in_specs,
            out_specs=pl.BlockSpec((tile_m, h_out), lambda i, k: (i, 0)),
            scratch_shapes=[pltpu.VMEM((tile_m, h_in), jnp.float32)],
        ),
        compiler_params=pltpu.CompilerParams(
            dimension_semantics=("parallel", "arbitrary"),
            vmem_limit_bytes=_vmem_limit_bytes(),
        ),
        cost_estimate=pl.CostEstimate(
            flops=flops, transcendentals=0, bytes_accessed=bytes_accessed
        ),
    )(*args)


def _pool_fc(p_f32, h_bf, wfc_f32, bfc_f32, *, tile_k):
    g_pad, n_pad = p_f32.shape
    h_pad = h_bf.shape[1]
    o_pad = wfc_f32.shape[1]
    num_k = n_pad // tile_k

    return pl.pallas_call(
        _pool_fc_kernel,
        out_shape=jax.ShapeDtypeStruct((g_pad, o_pad), jnp.float32),
        grid_spec=pltpu.PrefetchScalarGridSpec(
            num_scalar_prefetch=0,
            grid=(num_k,),
            in_specs=[
                pl.BlockSpec((g_pad, tile_k), lambda k: (0, k)),
                pl.BlockSpec((tile_k, h_pad), lambda k: (k, 0)),
                pl.BlockSpec((h_pad, o_pad), lambda k: (0, 0)),
                pl.BlockSpec((1, o_pad), lambda k: (0, 0)),
            ],
            out_specs=pl.BlockSpec((g_pad, o_pad), lambda k: (0, 0)),
            scratch_shapes=[pltpu.VMEM((g_pad, h_pad), jnp.float32)],
        ),
        compiler_params=pltpu.CompilerParams(
            dimension_semantics=("arbitrary",),
            vmem_limit_bytes=_vmem_limit_bytes(),
        ),
    )(p_f32, h_bf, wfc_f32, bfc_f32)


# ---------------------------------------------------------------------------
# Full forward: pad + cast, transform, 2x aggregate (W2 fused), pool + fc.
# ---------------------------------------------------------------------------
@jax.jit
def gnn_forward(a_hat, x, w1, b1, w2, b2, pool, wfc, bfc):
    n = a_hat.shape[0]
    g = pool.shape[0]
    f_in = x.shape[1]
    h1_dim = w1.shape[1]
    h2_dim = w2.shape[1]
    o_dim = wfc.shape[1]

    n_pad = _round_up(n, _PAD_N)          # padding decoupled from tile size
    f_pad = _round_up(f_in, 128)
    h1_pad = _round_up(h1_dim, 128)
    h2_pad = _round_up(h2_dim, 128)
    o_pad = _round_up(o_dim, 128)
    g_pad = _round_up(g, 8)               # f32 pooling matrix -> 8 sublanes

    tile_m, tile_k = _choose_tiles(n_pad)

    bf = jnp.bfloat16
    a_p = _pad2(a_hat, n_pad, n_pad).astype(bf)
    x_p = _pad2(x, n_pad, f_pad).astype(bf)
    w1_p = _pad2(w1, f_pad, h1_pad).astype(bf)
    b1_p = _pad2(b1.reshape(1, -1), 1, h1_pad).astype(jnp.float32)
    w2_p = _pad2(w2, h1_pad, h2_pad).astype(bf)
    b2_p = _pad2(b2.reshape(1, -1), 1, h2_pad).astype(jnp.float32)
    p_p = _pad2(pool, g_pad, n_pad).astype(jnp.float32)
    wfc_p = _pad2(wfc, h2_pad, o_pad).astype(jnp.float32)
    bfc_p = _pad2(bfc.reshape(1, -1), 1, o_pad).astype(jnp.float32)

    # Layer 1 feature transform.
    xw1 = _xw(x_p, w1_p, tile_m=tile_m)
    # Layer-1 aggregate with fused relu(.)@W2 epilogue -> XW2 directly (no H1 round-trip).
    xw2 = _gcn_aggregate(a_p, xw1, b1_p, tile_m=tile_m, tile_k=tile_k, w_next_bf=w2_p)
    # Layer-2 aggregate -> H2 (row axis stays "parallel" for v7x dual-TC).
    h2 = _gcn_aggregate(a_p, xw2, b2_p, tile_m=tile_m, tile_k=tile_k)
    # global_mean_pool + final Linear.
    out = _pool_fc(p_p, h2, wfc_p, bfc_p, tile_k=tile_k)
    return out[:g, :o_dim]


# ---------------------------------------------------------------------------
# Plain-JAX glue: graph preprocessing (sparse -> dense), parameter init, ref.
# ---------------------------------------------------------------------------
def build_norm_adj(edge_index, num_nodes):
    """A_hat = D^{-1/2} (A + I) D^{-1/2}, matching PyG GCNConv defaults."""
    src, dst = edge_index[0], edge_index[1]
    loop = jnp.arange(num_nodes, dtype=edge_index.dtype)
    src = jnp.concatenate([src, loop])
    dst = jnp.concatenate([dst, loop])
    a = jnp.zeros((num_nodes, num_nodes), jnp.float32).at[dst, src].add(1.0)
    deg = a.sum(axis=1)
    dinv = jnp.where(deg > 0, 1.0 / jnp.sqrt(deg), 0.0)
    return a * dinv[:, None] * dinv[None, :]


def build_pool_matrix(batch, num_graphs):
    """P[g, i] = 1/|graph g| if node i belongs to graph g (global_mean_pool)."""
    onehot = (batch[None, :] == jnp.arange(num_graphs)[:, None]).astype(jnp.float32)
    counts = jnp.maximum(onehot.sum(axis=1, keepdims=True), 1.0)
    return onehot / counts


def init_params(key, input_dim, hidden_dim, output_dim):
    k1, k2, k3 = jax.random.split(key, 3)
    scale = lambda fan_in: 1.0 / jnp.sqrt(jnp.float32(fan_in))
    w1 = jax.random.normal(k1, (input_dim, hidden_dim), jnp.float32) * scale(input_dim)
    b1 = jnp.zeros((1, hidden_dim), jnp.float32)
    w2 = jax.random.normal(k2, (hidden_dim, hidden_dim), jnp.float32) * scale(hidden_dim)
    b2 = jnp.zeros((1, hidden_dim), jnp.float32)
    wfc = jax.random.normal(k3, (hidden_dim, output_dim), jnp.float32) * scale(hidden_dim)
    bfc = jnp.zeros((1, output_dim), jnp.float32)
    return w1, b1, w2, b2, wfc, bfc


def reference_forward(a_hat, x, w1, b1, w2, b2, pool, wfc, bfc):
    """Pure-JAX reference replicating the kernel's bf16-with-f32-accum path."""
    bf, f32 = jnp.bfloat16, jnp.float32
    q = lambda t: t.astype(bf).astype(f32)          # bf16 rounding emulation
    a = q(a_hat)
    xw1 = q(q(x) @ q(w1))
    h1 = q(jnp.maximum(a @ xw1 + b1, 0.0))
    xw2 = q(h1 @ q(w2))
    h2 = q(jnp.maximum(a @ xw2 + b2, 0.0))
    pooled = pool @ h2                               # pooling matrix kept in f32
    return pooled @ wfc + bfc


if __name__ == "__main__":
    key = jax.random.PRNGKey(0)
    k_x, k_e, k_p = jax.random.split(key, 3)

    # Small synthetic graph batch: 2 graphs, 8 nodes each (N=16 total).
    num_nodes = 16
    num_graphs = 2
    num_edges = 40
    input_dim, hidden_dim, output_dim = 8, 32, 4

    x = jax.random.normal(k_x, (num_nodes, input_dim), jnp.float32)
    # Random edges constrained within each graph (nodes 0-7 -> graph 0, 8-15 -> graph 1).
    e_src = jax.random.randint(k_e, (num_edges,), 0, 8, jnp.int32)
    e_off = jnp.where(jnp.arange(num_edges) < num_edges // 2, 0, 8).astype(jnp.int32)
    e_dst = jax.random.randint(jax.random.fold_in(k_e, 1), (num_edges,), 0, 8, jnp.int32)
    edge_index = jnp.stack([e_src + e_off, e_dst + e_off], axis=0)
    batch = jnp.where(jnp.arange(num_nodes) < 8, 0, 1).astype(jnp.int32)

    a_hat = build_norm_adj(edge_index, num_nodes)
    pool = build_pool_matrix(batch, num_graphs)
    w1, b1, w2, b2, wfc, bfc = init_params(k_p, input_dim, hidden_dim, output_dim)

    out = gnn_forward(a_hat, x, w1, b1, w2, b2, pool, wfc, bfc)
    out = jax.block_until_ready(out)

    ref = reference_forward(a_hat, x, w1, b1, w2, b2, pool, wfc, bfc)
    assert out.shape == (num_graphs, output_dim)
    assert jnp.allclose(out, ref, atol=2e-3, rtol=2e-3), (out, ref)

    print("KERNEL_OK")
</pallas_src>

<mosaic_0001>
module attributes {stable_mosaic.version = 11 : i64} {
  func.func @_xw_kernel(%arg0: i32, %arg1: memref<256x128xbf16, #tpu.memory_space<vmem>>, %arg2: memref<128x128xbf16, #tpu.memory_space<vmem>>, %arg3: memref<256x128xbf16, #tpu.memory_space<vmem>>) attributes {dimension_semantics = [#tpu.dimension_semantics<parallel>], iteration_bounds = array<i64: 1>, scalar_prefetch = 0 : i64, scratch_operands = 0 : i64, tpu.core_type = #tpu.core_type<tc>, window_params = [{transform_indices = @transform_0, window_bounds = array<i64: 256, 128>}, {pipeline_mode = #tpu.pipeline_mode<synchronous>, transform_indices = @transform_1, window_bounds = array<i64: 128, 128>}, {transform_indices = @transform_2, window_bounds = array<i64: 256, 128>}]} {
    %c0 = arith.constant 0 : index
    %c0_0 = arith.constant 0 : index
    %0 = vector.load %arg1[%c0, %c0_0] : memref<256x128xbf16, #tpu.memory_space<vmem>>, vector<256x128xbf16>
    %c0_1 = arith.constant 0 : index
    %c0_2 = arith.constant 0 : index
    %1 = vector.load %arg2[%c0_1, %c0_2] : memref<128x128xbf16, #tpu.memory_space<vmem>>, vector<128x128xbf16>
    %cst = arith.constant dense<0.000000e+00> : vector<256x128xf32>
    %2 = tpu.matmul %0, %1, %cst {dimension_numbers = #tpu.dot_dimension_numbers<[1], [0], [0], [1], [0, 0, 1, 1], [], []>} : vector<256x128xbf16>, vector<128x128xbf16>, vector<256x128xf32> -> vector<256x128xf32>
    %3 = arith.truncf %2 : vector<256x128xf32> to vector<256x128xbf16>
    %c0_3 = arith.constant 0 : index
    %c0_4 = arith.constant 0 : index
    %4 = vector.load %arg3[%c0_3, %c0_4] : memref<256x128xbf16, #tpu.memory_space<vmem>>, vector<256x128xbf16>
    tpu.vector_store %arg3[%c0_3, %c0_4], %3 {strides = array<i32>} : memref<256x128xbf16, #tpu.memory_space<vmem>>, vector<256x128xbf16>,
    return
  }
  func.func @transform_0(%arg0: i32) -> (i32, i32) {
    %c0_i32 = arith.constant 0 : i32
    %c0_i32_0 = arith.constant 0 : i32
    return %arg0, %c0_i32 : i32, i32
  }
  func.func @transform_1(%arg0: i32) -> (i32, i32) {
    %c0_i32 = arith.constant 0 : i32
    %c0_i32_0 = arith.constant 0 : i32
    %c0_i32_1 = arith.constant 0 : i32
    return %c0_i32, %c0_i32_0 : i32, i32
  }
  func.func @transform_2(%arg0: i32) -> (i32, i32) {
    %c0_i32 = arith.constant 0 : i32
    %c0_i32_0 = arith.constant 0 : i32
    return %arg0, %c0_i32 : i32, i32
  }
}

module attributes {stable_mosaic.version = 11 : i64} {
  func.func @kernel(%arg0: i32, %arg1: i32, %arg2: memref<256x256xbf16, #tpu.memory_space<vmem>>, %arg3: memref<256x128xbf16, #tpu.memory_space<vmem>>, %arg4: memref<1x128xf32, #tpu.memory_space<vmem>>, %arg5: memref<256x128xbf16, #tpu.memory_space<vmem>>, %arg6: memref<256x128xf32, #tpu.memory_space<vmem>>) attributes {dimension_semantics = [#tpu.dimension_semantics<parallel>, #tpu.dimension_semantics<arbitrary>], iteration_bounds = array<i64: 1, 1>, scalar_prefetch = 0 : i64, scratch_operands = 1 : i64, tpu.core_type = #tpu.core_type<tc>, window_params = [{transform_indices = @transform_0, window_bounds = array<i64: 256, 256>}, {pipeline_mode = #tpu.pipeline_mode<synchronous>, transform_indices = @transform_1, window_bounds = array<i64: 256, 128>}, {pipeline_mode = #tpu.pipeline_mode<synchronous>, transform_indices = @transform_2, window_bounds = array<i64: 1, 128>}, {transform_indices = @transform_3, window_bounds = array<i64: 256, 128>}]} {
    %c0_i32 = arith.constant 0 : i32
    %0 = arith.cmpi eq, %arg1, %c0_i32 : i32
    %1 = arith.extui %0 : i1 to i32
    %c0_i32_0 = arith.constant 0 : i32
    %2 = arith.cmpi ne, %1, %c0_i32_0 : i32
    scf.if %2 {
      %cst_9 = arith.constant 0.000000e+00 : f32
      %15 = vector.broadcast %cst_9 : f32 to vector<256x128xf32>
      %c0_10 = arith.constant 0 : index
      %c0_11 = arith.constant 0 : index
      %16 = vector.load %arg6[%c0_10, %c0_11] : memref<256x128xf32, #tpu.memory_space<vmem>>, vector<256x128xf32>
      tpu.vector_store %arg6[%c0_10, %c0_11], %15 {strides = array<i32>} : memref<256x128xf32, #tpu.memory_space<vmem>>, vector<256x128xf32>,
    } else {
    }
    %c256_i32 = arith.constant 256 : i32
    %3 = arith.muli %arg1, %c256_i32 : i32
    %4 = tpu.assume_multiple %3, 256 : i32
    %5 = arith.index_cast %4 : i32 to index
    %c0 = arith.constant 0 : index
    %6 = vector.load %arg3[%5, %c0] : memref<256x128xbf16, #tpu.memory_space<vmem>>, vector<256x128xbf16>
    %c0_1 = arith.constant 0 : index
    %c0_2 = arith.constant 0 : index
    %7 = vector.load %arg6[%c0_1, %c0_2] : memref<256x128xf32, #tpu.memory_space<vmem>>, vector<256x128xf32>
    %c0_3 = arith.constant 0 : index
    %c0_4 = arith.constant 0 : index
    %8 = vector.load %arg2[%c0_3, %c0_4] : memref<256x256xbf16, #tpu.memory_space<vmem>>, vector<256x256xbf16>
    %cst = arith.constant dense<0.000000e+00> : vector<256x128xf32>
    %9 = tpu.matmul %8, %6, %cst {dimension_numbers = #tpu.dot_dimension_numbers<[1], [0], [0], [1], [0, 0, 1, 1], [], []>} : vector<256x256xbf16>, vector<256x128xbf16>, vector<256x128xf32> -> vector<256x128xf32>
    %10 = arith.addf %7, %9 : vector<256x128xf32>
    %c0_5 = arith.constant 0 : index
    %c0_6 = arith.constant 0 : index
    %11 = vector.load %arg6[%c0_5, %c0_6] : memref<256x128xf32, #tpu.memory_space<vmem>>, vector<256x128xf32>
    tpu.vector_store %arg6[%c0_5, %c0_6], %10 {strides = array<i32>} : memref<256x128xf32, #tpu.memory_space<vmem>>, vector<256x128xf32>,
    %c0_i32_7 = arith.constant 0 : i32
    %12 = arith.cmpi eq, %arg1, %c0_i32_7 : i32
    %13 = arith.extui %12 : i1 to i32
    %c0_i32_8 = arith.constant 0 : i32
    %14 = arith.cmpi ne, %13, %c0_i32_8 : i32
    scf.if %14 {
      %c0_9 = arith.constant 0 : index
      %c0_10 = arith.constant 0 : index
      %15 = vector.load %arg6[%c0_9, %c0_10] : memref<256x128xf32, #tpu.memory_space<vmem>>, vector<256x128xf32>
      %c0_11 = arith.constant 0 : index
      %c0_12 = arith.constant 0 : index
      %16 = vector.load %arg4[%c0_11, %c0_12] : memref<1x128xf32, #tpu.memory_space<vmem>>, vector<1x128xf32>
      %17 = vector.broadcast %16 : vector<1x128xf32> to vector<256x128xf32>
      %18 = arith.addf %15, %17 : vector<256x128xf32>
      %cst_13 = arith.constant 0.000000e+00 : f32
      %19 = vector.broadcast %cst_13 : f32 to vector<256x128xf32>
      %20 = arith.maximumf %18, %19 : vector<256x128xf32>
      %21 = arith.truncf %20 : vector<256x128xf32> to vector<256x128xbf16>
      %c0_14 = arith.constant 0 : index
      %c0_15 = arith.constant 0 : index
      %22 = vector.load %arg5[%c0_14, %c0_15] : memref<256x128xbf16, #tpu.memory_space<vmem>>, vector<256x128xbf16>
      tpu.vector_store %arg5[%c0_14, %c0_15], %21 {strides = array<i32>} : memref<256x128xbf16, #tpu.memory_space<vmem>>, vector<256x128xbf16>,
    } else {
    }
    return
  }
  func.func @transform_0(%arg0: i32, %arg1: i32) -> (i32, i32) {
    %c0_i32 = arith.constant 0 : i32
    return %arg0, %arg1 : i32, i32
  }
  func.func @transform_1(%arg0: i32, %arg1: i32) -> (i32, i32) {
    %c0_i32 = arith.constant 0 : i32
    %c0_i32_0 = arith.constant 0 : i32
    %c0_i32_1 = arith.constant 0 : i32
    return %c0_i32, %c0_i32_0 : i32, i32
  }
  func.func @transform_2(%arg0: i32, %arg1: i32) -> (i32, i32) {
    %c0_i32 = arith.constant 0 : i32
    %c0_i32_0 = arith.constant 0 : i32
    %c0_i32_1 = arith.constant 0 : i32
    return %c0_i32, %c0_i32_0 : i32, i32
  }
  func.func @transform_3(%arg0: i32, %arg1: i32) -> (i32, i32) {
    %c0_i32 = arith.constant 0 : i32
    %c0_i32_0 = arith.constant 0 : i32
    return %arg0, %c0_i32 : i32, i32
  }
}

module attributes {stable_mosaic.version = 11 : i64} {
  func.func @kernel(%arg0: i32, %arg1: i32, %arg2: memref<256x256xbf16, #tpu.memory_space<vmem>>, %arg3: memref<256x128xbf16, #tpu.memory_space<vmem>>, %arg4: memref<1x128xf32, #tpu.memory_space<vmem>>, %arg5: memref<128x128xbf16, #tpu.memory_space<vmem>>, %arg6: memref<256x128xbf16, #tpu.memory_space<vmem>>, %arg7: memref<256x128xf32, #tpu.memory_space<vmem>>) attributes {dimension_semantics = [#tpu.dimension_semantics<parallel>, #tpu.dimension_semantics<arbitrary>], iteration_bounds = array<i64: 1, 1>, scalar_prefetch = 0 : i64, scratch_operands = 1 : i64, tpu.core_type = #tpu.core_type<tc>, window_params = [{transform_indices = @transform_0, window_bounds = array<i64: 256, 256>}, {pipeline_mode = #tpu.pipeline_mode<synchronous>, transform_indices = @transform_1, window_bounds = array<i64: 256, 128>}, {pipeline_mode = #tpu.pipeline_mode<synchronous>, transform_indices = @transform_2, window_bounds = array<i64: 1, 128>}, {pipeline_mode = #tpu.pipeline_mode<synchronous>, transform_indices = @transform_3, window_bounds = array<i64: 128, 128>}, {transform_indices = @transform_4, window_bounds = array<i64: 256, 128>}]} {
    %c0_i32 = arith.constant 0 : i32
    %0 = arith.cmpi eq, %arg1, %c0_i32 : i32
    %1 = arith.extui %0 : i1 to i32
    %c0_i32_0 = arith.constant 0 : i32
    %2 = arith.cmpi ne, %1, %c0_i32_0 : i32
    scf.if %2 {
      %cst_9 = arith.constant 0.000000e+00 : f32
      %15 = vector.broadcast %cst_9 : f32 to vector<256x128xf32>
      %c0_10 = arith.constant 0 : index
      %c0_11 = arith.constant 0 : index
      %16 = vector.load %arg7[%c0_10, %c0_11] : memref<256x128xf32, #tpu.memory_space<vmem>>, vector<256x128xf32>
      tpu.vector_store %arg7[%c0_10, %c0_11], %15 {strides = array<i32>} : memref<256x128xf32, #tpu.memory_space<vmem>>, vector<256x128xf32>,
    } else {
    }
    %c256_i32 = arith.constant 256 : i32
    %3 = arith.muli %arg1, %c256_i32 : i32
    %4 = tpu.assume_multiple %3, 256 : i32
    %5 = arith.index_cast %4 : i32 to index
    %c0 = arith.constant 0 : index
    %6 = vector.load %arg3[%5, %c0] : memref<256x128xbf16, #tpu.memory_space<vmem>>, vector<256x128xbf16>
    %c0_1 = arith.constant 0 : index
    %c0_2 = arith.constant 0 : index
    %7 = vector.load %arg7[%c0_1, %c0_2] : memref<256x128xf32, #tpu.memory_space<vmem>>, vector<256x128xf32>
    %c0_3 = arith.constant 0 : index
    %c0_4 = arith.constant 0 : index
    %8 = vector.load %arg2[%c0_3, %c0_4] : memref<256x256xbf16, #tpu.memory_space<vmem>>, vector<256x256xbf16>
    %cst = arith.constant dense<0.000000e+00> : vector<256x128xf32>
    %9 = tpu.matmul %8, %6, %cst {dimension_numbers = #tpu.dot_dimension_numbers<[1], [0], [0], [1], [0, 0, 1, 1], [], []>} : vector<256x256xbf16>, vector<256x128xbf16>, vector<256x128xf32> -> vector<256x128xf32>
    %10 = arith.addf %7, %9 : vector<256x128xf32>
    %c0_5 = arith.constant 0 : index
    %c0_6 = arith.constant 0 : index
    %11 = vector.load %arg7[%c0_5, %c0_6] : memref<256x128xf32, #tpu.memory_space<vmem>>, vector<256x128xf32>
    tpu.vector_store %arg7[%c0_5, %c0_6], %10 {strides = array<i32>} : memref<256x128xf32, #tpu.memory_space<vmem>>, vector<256x128xf32>,
    %c0_i32_7 = arith.constant 0 : i32
    %12 = arith.cmpi eq, %arg1, %c0_i32_7 : i32
    %13 = arith.extui %12 : i1 to i32
    %c0_i32_8 = arith.constant 0 : i32
    %14 = arith.cmpi ne, %13, %c0_i32_8 : i32
    scf.if %14 {
      %c0_9 = arith.constant 0 : index
      %c0_10 = arith.constant 0 : index
      %15 = vector.load %arg7[%c0_9, %c0_10] : memref<256x128xf32, #tpu.memory_space<vmem>>, vector<256x128xf32>
      %c0_11 = arith.constant 0 : index
      %c0_12 = arith.constant 0 : index
      %16 = vector.load %arg4[%c0_11, %c0_12] : memref<1x128xf32, #tpu.memory_space<vmem>>, vector<1x128xf32>
      %17 = vector.broadcast %16 : vector<1x128xf32> to vector<256x128xf32>
      %18 = arith.addf %15, %17 : vector<256x128xf32>
      %cst_13 = arith.constant 0.000000e+00 : f32
      %19 = vector.broadcast %cst_13 : f32 to vector<256x128xf32>
      %20 = arith.maximumf %18, %19 : vector<256x128xf32>
      %21 = arith.truncf %20 : vector<256x128xf32> to vector<256x128xbf16>
      %c0_14 = arith.constant 0 : index
      %c0_15 = arith.constant 0 : index
      %22 = vector.load %arg5[%c0_14, %c0_15] : memref<128x128xbf16, #tpu.memory_space<vmem>>, vector<128x128xbf16>
      %cst_16 = arith.constant dense<0.000000e+00> : vector<256x128xf32>
      %23 = tpu.matmul %21, %22, %cst_16 {dimension_numbers = #tpu.dot_dimension_numbers<[1], [0], [0], [1], [0, 0, 1, 1], [], []>} : vector<256x128xbf16>, vector<128x128xbf16>, vector<256x128xf32> -> vector<256x128xf32>
      %24 = arith.truncf %23 : vector<256x128xf32> to vector<256x128xbf16>
      %c0_17 = arith.constant 0 : index
      %c0_18 = arith.constant 0 : index
      %25 = vector.load %arg6[%c0_17, %c0_18] : memref<256x128xbf16, #tpu.memory_space<vmem>>, vector<256x128xbf16>
      tpu.vector_store %arg6[%c0_17, %c0_18], %24 {strides = array<i32>} : memref<256x128xbf16, #tpu.memory_space<vmem>>, vector<256x128xbf16>,
    } else {
    }
    return
  }
  func.func @transform_0(%arg0: i32, %arg1: i32) -> (i32, i32) {
    %c0_i32 = arith.constant 0 : i32
    return %arg0, %arg1 : i32, i32
  }
  func.func @transform_1(%arg0: i32, %arg1: i32) -> (i32, i32) {
    %c0_i32 = arith.constant 0 : i32
    %c0_i32_0 = arith.constant 0 : i32
    %c0_i32_1 = arith.constant 0 : i32
    return %c0_i32, %c0_i32_0 : i32, i32
  }
  func.func @transform_2(%arg0: i32, %arg1: i32) -> (i32, i32) {
    %c0_i32 = arith.constant 0 : i32
    %c0_i32_0 = arith.constant 0 : i32
    %c0_i32_1 = arith.constant 0 : i32
    return %c0_i32, %c0_i32_0 : i32, i32
  }
  func.func @transform_3(%arg0: i32, %arg1: i32) -> (i32, i32) {
    %c0_i32 = arith.constant 0 : i32
    %c0_i32_0 = arith.constant 0 : i32
    %c0_i32_1 = arith.constant 0 : i32
    return %c0_i32, %c0_i32_0 : i32, i32
  }
  func.func @transform_4(%arg0: i32, %arg1: i32) -> (i32, i32) {
    %c0_i32 = arith.constant 0 : i32
    %c0_i32_0 = arith.constant 0 : i32
    return %arg0, %c0_i32 : i32, i32
  }
}

module attributes {stable_mosaic.version = 11 : i64} {
  func.func @_pool_fc_kernel(%arg0: i32, %arg1: memref<8x256xf32, #tpu.memory_space<vmem>>, %arg2: memref<256x128xbf16, #tpu.memory_space<vmem>>, %arg3: memref<128x128xf32, #tpu.memory_space<vmem>>, %arg4: memref<1x128xf32, #tpu.memory_space<vmem>>, %arg5: memref<8x128xf32, #tpu.memory_space<vmem>>, %arg6: memref<8x128xf32, #tpu.memory_space<vmem>>) attributes {dimension_semantics = [#tpu.dimension_semantics<arbitrary>], iteration_bounds = array<i64: 1>, scalar_prefetch = 0 : i64, scratch_operands = 1 : i64, tpu.core_type = #tpu.core_type<tc>, window_params = [{transform_indices = @transform_0, window_bounds = array<i64: 8, 256>}, {transform_indices = @transform_1, window_bounds = array<i64: 256, 128>}, {pipeline_mode = #tpu.pipeline_mode<synchronous>, transform_indices = @transform_2, window_bounds = array<i64: 128, 128>}, {pipeline_mode = #tpu.pipeline_mode<synchronous>, transform_indices = @transform_3, window_bounds = array<i64: 1, 128>}, {pipeline_mode = #tpu.pipeline_mode<synchronous>, transform_indices = @transform_4, window_bounds = array<i64: 8, 128>}]} {
    %c0_i32 = arith.constant 0 : i32
    %0 = arith.cmpi eq, %arg0, %c0_i32 : i32
    %1 = arith.extui %0 : i1 to i32
    %c0_i32_0 = arith.constant 0 : i32
    %2 = arith.cmpi ne, %1, %c0_i32_0 : i32
    scf.if %2 {
      %cst_10 = arith.constant 0.000000e+00 : f32
      %13 = vector.broadcast %cst_10 : f32 to vector<8x128xf32>
      %c0_11 = arith.constant 0 : index
      %c0_12 = arith.constant 0 : index
      %14 = vector.load %arg6[%c0_11, %c0_12] : memref<8x128xf32, #tpu.memory_space<vmem>>, vector<8x128xf32>
      tpu.vector_store %arg6[%c0_11, %c0_12], %13 {strides = array<i32>} : memref<8x128xf32, #tpu.memory_space<vmem>>, vector<8x128xf32>,
    } else {
    }
    %c0 = arith.constant 0 : index
    %c0_1 = arith.constant 0 : index
    %3 = vector.load %arg6[%c0, %c0_1] : memref<8x128xf32, #tpu.memory_space<vmem>>, vector<8x128xf32>
    %c0_2 = arith.constant 0 : index
    %c0_3 = arith.constant 0 : index
    %4 = vector.load %arg1[%c0_2, %c0_3] : memref<8x256xf32, #tpu.memory_space<vmem>>, vector<8x256xf32>
    %c0_4 = arith.constant 0 : index
    %c0_5 = arith.constant 0 : index
    %5 = vector.load %arg2[%c0_4, %c0_5] : memref<256x128xbf16, #tpu.memory_space<vmem>>, vector<256x128xbf16>
    %6 = arith.extf %5 : vector<256x128xbf16> to vector<256x128xf32>
    %cst = arith.constant dense<0.000000e+00> : vector<8x128xf32>
    %7 = tpu.matmul %4, %6, %cst {dimension_numbers = #tpu.dot_dimension_numbers<[1], [0], [0], [1], [0, 0, 1, 1], [], []>} : vector<8x256xf32>, vector<256x128xf32>, vector<8x128xf32> -> vector<8x128xf32>
    %8 = arith.addf %3, %7 : vector<8x128xf32>
    %c0_6 = arith.constant 0 : index
    %c0_7 = arith.constant 0 : index
    %9 = vector.load %arg6[%c0_6, %c0_7] : memref<8x128xf32, #tpu.memory_space<vmem>>, vector<8x128xf32>
    tpu.vector_store %arg6[%c0_6, %c0_7], %8 {strides = array<i32>} : memref<8x128xf32, #tpu.memory_space<vmem>>, vector<8x128xf32>,
    %c0_i32_8 = arith.constant 0 : i32
    %10 = arith.cmpi eq, %arg0, %c0_i32_8 : i32
    %11 = arith.extui %10 : i1 to i32
    %c0_i32_9 = arith.constant 0 : i32
    %12 = arith.cmpi ne, %11, %c0_i32_9 : i32
    scf.if %12 {
      %c0_10 = arith.constant 0 : index
      %c0_11 = arith.constant 0 : index
      %13 = vector.load %arg6[%c0_10, %c0_11] : memref<8x128xf32, #tpu.memory_space<vmem>>, vector<8x128xf32>
      %c0_12 = arith.constant 0 : index
      %c0_13 = arith.constant 0 : index
      %14 = vector.load %arg3[%c0_12, %c0_13] : memref<128x128xf32, #tpu.memory_space<vmem>>, vector<128x128xf32>
      %cst_14 = arith.constant dense<0.000000e+00> : vector<8x128xf32>
      %15 = tpu.matmul %13, %14, %cst_14 {dimension_numbers = #tpu.dot_dimension_numbers<[1], [0], [0], [1], [0, 0, 1, 1], [], []>} : vector<8x128xf32>, vector<128x128xf32>, vector<8x128xf32> -> vector<8x128xf32>
      %c0_15 = arith.constant 0 : index
      %c0_16 = arith.constant 0 : index
      %16 = vector.load %arg4[%c0_15, %c0_16] : memref<1x128xf32, #tpu.memory_space<vmem>>, vector<1x128xf32>
      %17 = vector.broadcast %16 : vector<1x128xf32> to vector<8x128xf32>
      %18 = arith.addf %15, %17 : vector<8x128xf32>
      %c0_17 = arith.constant 0 : index
      %c0_18 = arith.constant 0 : index
      %19 = vector.load %arg5[%c0_17, %c0_18] : memref<8x128xf32, #tpu.memory_space<vmem>>, vector<8x128xf32>
      tpu.vector_store %arg5[%c0_17, %c0_18], %18 {strides = array<i32>} : memref<8x128xf32, #tpu.memory_space<vmem>>, vector<8x128xf32>,
    } else {
    }
    return
  }
  func.func @transform_0(%arg0: i32) -> (i32, i32) {
    %c0_i32 = arith.constant 0 : i32
    %c0_i32_0 = arith.constant 0 : i32
    return %c0_i32, %arg0 : i32, i32
  }
  func.func @transform_1(%arg0: i32) -> (i32, i32) {
    %c0_i32 = arith.constant 0 : i32
    %c0_i32_0 = arith.constant 0 : i32
    return %arg0, %c0_i32 : i32, i32
  }
  func.func @transform_2(%arg0: i32) -> (i32, i32) {
    %c0_i32 = arith.constant 0 : i32
    %c0_i32_0 = arith.constant 0 : i32
    %c0_i32_1 = arith.constant 0 : i32
    return %c0_i32, %c0_i32_0 : i32, i32
  }
  func.func @transform_3(%arg0: i32) -> (i32, i32) {
    %c0_i32 = arith.constant 0 : i32
    %c0_i32_0 = arith.constant 0 : i32
    %c0_i32_1 = arith.constant 0 : i32
    return %c0_i32, %c0_i32_0 : i32, i32
  }
  func.func @transform_4(%arg0: i32) -> (i32, i32) {
    %c0_i32 = arith.constant 0 : i32
    %c0_i32_0 = arith.constant 0 : i32
    %c0_i32_1 = arith.constant 0 : i32
    return %c0_i32, %c0_i32_0 : i32, i32
  }
}

</mosaic_0001>

<llo_original>
// kernel: gnn_forward.4
$region0: #{gnn_forward.4}
  #allocation0 [shape = 'u32[]', space=smem, size = 0x4, offset = 0x4, fixed_abs, tag = 'smem constant byte address 0x4 - core index']
  #allocation1 [shape = 'u32[72,128]{1,0:T(1,128)}', space=vmem, size = 0x9000, scoped, tag = 'internal scratch']
  %s0 = inlined_call_operand.vmem [shape: bf16[256,128], index: 0, kind: input, shape index: {}]
  %s1 = inlined_call_operand.vmem [shape: bf16[128,128], index: 1, kind: input, shape index: {}]
  %s2 = inlined_call_operand.vmem [shape: bf16[256,128], index: 2, kind: output, shape index: {}]
  %s3 = sld [smem:[#allocation0]]
  $region18: #{gnn_forward.4} parent=0
    _
  %s5 = ssub.s32 1, %s3
  %s6 = scalar_select 0, %s5, %s3
  // Predicated region
  $region2: #{gnn_forward.4} parent=0 // pred_check
    _
  $region3: #{gnn_forward.4} parent=0 // pred_check_branch
    %8 = sbr.rel (0) target = $region5
  $region4: #{gnn_forward.4} parent=0 // pred_region
    _
  $region5: #{gnn_forward.4} parent=0 // pred_fallthru
    _
  // Predicated region
  $region6: #{gnn_forward.4} parent=0 // pred_check
    _
  $region7: #{gnn_forward.4} parent=0 // pred_check_branch
    %10 = sbr.rel (0) target = $region9
  $region8: #{gnn_forward.4} parent=0 // pred_region
    _
  $region9: #{gnn_forward.4} parent=0 // pred_fallthru
    _
  %v11 = vld [vmem:[%s0] sm:$0xf]
  %v12 = vld [vmem:[%s0 + $0x4] sm:$0xf]
  %v13 = vld [vmem:[%s0 + $0x8] sm:$0xf]
  %v14 = vld [vmem:[%s0 + $0xc] sm:$0xf]
  %v15 = vld [vmem:[%s0 + $0x10] sm:$0xf]
  %v16 = vld [vmem:[%s0 + $0x14] sm:$0xf]
  %v17 = vld [vmem:[%s0 + $0x18] sm:$0xf]
  %v18 = vld [vmem:[%s0 + $0x1c] sm:$0xf]
  %v19 = vld [vmem:[%s0 + $0x20] sm:$0xf]
  %v20 = vld [vmem:[%s0 + $0x24] sm:$0xf]
  %v21 = vld [vmem:[%s0 + $0x28] sm:$0xf]
  %v22 = vld [vmem:[%s0 + $0x2c] sm:$0xf]
  %v23 = vld [vmem:[%s0 + $0x30] sm:$0xf]
  %v24 = vld [vmem:[%s0 + $0x34] sm:$0xf]
  %v25 = vld [vmem:[%s0 + $0x38] sm:$0xf]
  %v26 = vld [vmem:[%s0 + $0x3c] sm:$0xf]
  %v27 = vld [vmem:[%s0 + $0x40] sm:$0xf]
  %v28 = vld [vmem:[%s0 + $0x44] sm:$0xf]
  %v29 = vld [vmem:[%s0 + $0x48] sm:$0xf]
  %v30 = vld [vmem:[%s0 + $0x4c] sm:$0xf]
  %v31 = vld [vmem:[%s0 + $0x50] sm:$0xf]
  %v32 = vld [vmem:[%s0 + $0x54] sm:$0xf]
  %v33 = vld [vmem:[%s0 + $0x58] sm:$0xf]
  %v34 = vld [vmem:[%s0 + $0x5c] sm:$0xf]
  %v35 = vld [vmem:[%s0 + $0x60] sm:$0xf]
  %v36 = vld [vmem:[%s0 + $0x64] sm:$0xf]
  %v37 = vld [vmem:[%s0 + $0x68] sm:$0xf]
  %v38 = vld [vmem:[%s0 + $0x6c] sm:$0xf]
  %v39 = vld [vmem:[%s0 + $0x70] sm:$0xf]
  %v40 = vld [vmem:[%s0 + $0x74] sm:$0xf]
  %v41 = vld [vmem:[%s0 + $0x78] sm:$0xf]
  %v42 = vld [vmem:[%s0 + $0x7c] sm:$0xf]
  %v43 = vld [vmem:[%s1] sm:$0xf]
  %v44 = vld [vmem:[%s1 + $0x4] sm:$0xf]
  %v45 = vld [vmem:[%s1 + $0x8] sm:$0xf]
  %v46 = vld [vmem:[%s1 + $0xc] sm:$0xf]
  %v47 = vld [vmem:[%s1 + $0x10] sm:$0xf]
  %v48 = vld [vmem:[%s1 + $0x14] sm:$0xf]
  %v49 = vld [vmem:[%s1 + $0x18] sm:$0xf]
  %v50 = vld [vmem:[%s1 + $0x1c] sm:$0xf]
  %v51 = vld [vmem:[%s1 + $0x20] sm:$0xf]
  %v52 = vld [vmem:[%s1 + $0x24] sm:$0xf]
  %v53 = vld [vmem:[%s1 + $0x28] sm:$0xf]
  %v54 = vld [vmem:[%s1 + $0x2c] sm:$0xf]
  %v55 = vld [vmem:[%s1 + $0x30] sm:$0xf]
  %v56 = vld [vmem:[%s1 + $0x34] sm:$0xf]
  %v57 = vld [vmem:[%s1 + $0x38] sm:$0xf]
  %v58 = vld [vmem:[%s1 + $0x3c] sm:$0xf]
  %v91 = vunpack.c.l.b16 %v11
  %v92 = vunpack.c.l.b16 %v12
  %v93 = vunpack.c.l.b16 %v13
  %v94 = vunpack.c.l.b16 %v14
  %v95 = vunpack.c.l.b16 %v15
  %v96 = vunpack.c.l.b16 %v16
  %v97 = vunpack.c.l.b16 %v17
  %v98 = vunpack.c.l.b16 %v18
  %v99 = vunpack.c.l.b16 %v19
  %v100 = vunpack.c.l.b16 %v20
  %v101 = vunpack.c.l.b16 %v21
  %v102 = vunpack.c.l.b16 %v22
  %v103 = vunpack.c.l.b16 %v23
  %v104 = vunpack.c.l.b16 %v24
  %v105 = vunpack.c.l.b16 %v25
  %v106 = vunpack.c.l.b16 %v26
  %v107 = vunpack.c.l.b16 %v27
  %v108 = vunpack.c.l.b16 %v28
  %v109 = vunpack.c.l.b16 %v29
  %v110 = vunpack.c.l.b16 %v30
  %v111 = vunpack.c.l.b16 %v31
  %v112 = vunpack.c.l.b16 %v32
  %v113 = vunpack.c.l.b16 %v33
  %v114 = vunpack.c.l.b16 %v34
  %v115 = vunpack.c.l.b16 %v35
  %v116 = vunpack.c.l.b16 %v36
  %v117 = vunpack.c.l.b16 %v37
  %v118 = vunpack.c.l.b16 %v38
  %v119 = vunpack.c.l.b16 %v39
  %v120 = vunpack.c.l.b16 %v40
  %v121 = vunpack.c.l.b16 %v41
  %v122 = vunpack.c.l.b16 %v42
  %v123 = vpack.c.b16 %v92, %v91
  %v124 = vpack.c.b16 %v94, %v93
  %v125 = vpack.c.b16 %v96, %v95
  %v126 = vpack.c.b16 %v98, %v97
  %v127 = vpack.c.b16 %v100, %v99
  %v128 = vpack.c.b16 %v102, %v101
  %v129 = vpack.c.b16 %v104, %v103
  %v130 = vpack.c.b16 %v106, %v105
  %v131 = vpack.c.b16 %v108, %v107
  %v132 = vpack.c.b16 %v110, %v109
  %v133 = vpack.c.b16 %v112, %v111
  %v134 = vpack.c.b16 %v114, %v113
  %v135 = vpack.c.b16 %v116, %v115
  %v136 = vpack.c.b16 %v118, %v117
  %v137 = vpack.c.b16 %v120, %v119
  %v138 = vpack.c.b16 %v122, %v121
  %v171 = vunpack.c.l.b16 %v43
  %v172 = vunpack.c.l.b16 %v44
  %v173 = vunpack.c.l.b16 %v45
  %v174 = vunpack.c.l.b16 %v46
  %v175 = vunpack.c.l.b16 %v47
  %v176 = vunpack.c.l.b16 %v48
  %v177 = vunpack.c.l.b16 %v49
  %v178 = vunpack.c.l.b16 %v50
  %v179 = vunpack.c.l.b16 %v51
  %v180 = vunpack.c.l.b16 %v52
  %v181 = vunpack.c.l.b16 %v53
  %v182 = vunpack.c.l.b16 %v54
  %v183 = vunpack.c.l.b16 %v55
  %v184 = vunpack.c.l.b16 %v56
  %v185 = vunpack.c.l.b16 %v57
  %v186 = vunpack.c.l.b16 %v58
  %v187 = vpack.c.b16 %v172, %v171
  %v188 = vpack.c.b16 %v174, %v173
  %v189 = vpack.c.b16 %v176, %v175
  %v190 = vpack.c.b16 %v178, %v177
  %v191 = vpack.c.b16 %v180, %v179
  %v192 = vpack.c.b16 %v182, %v181
  %v193 = vpack.c.b16 %v184, %v183
  %v194 = vpack.c.b16 %v186, %v185
  %203 = vmatpush.bf16.msra.mxu0 %v194
  %204 = vmatpush.bf16.msra.mxu0 %v193
  %205 = vmatpush.bf16.msra.mxu0 %v192
  %206 = vmatpush.bf16.msra.mxu0 %v191
  %207 = vmatpush.bf16.msra.mxu0 %v190
  %208 = vmatpush.bf16.msra.mxu0 %v189
  %209 = vmatpush.bf16.msra.mxu0 %v188
  %210 = vmatpush.bf16.msra.mxu0 %v187
  %211 = vmatmul.bf16.gmra.mxu0 %v123
  %v212 = vpop.f32.mrf.mxu0
  %v213 = vadd.f32 0.0, %v212
  %v214 = vpop.f32.mrf.mxu0
  %v215 = vadd.f32 0.0, %v214
  %216 = vmatmul.bf16.gmra.mxu0 %v124
  %v217 = vpop.f32.mrf.mxu0
  %v218 = vadd.f32 0.0, %v217
  %v219 = vpop.f32.mrf.mxu0
  %v220 = vadd.f32 0.0, %v219
  %221 = vmatmul.bf16.gmra.mxu0 %v125
  %v222 = vpop.f32.mrf.mxu0
  %v223 = vadd.f32 0.0, %v222
  %v224 = vpop.f32.mrf.mxu0
  %v225 = vadd.f32 0.0, %v224
  %226 = vmatmul.bf16.gmra.mxu0 %v126
  %v227 = vpop.f32.mrf.mxu0
  %v228 = vadd.f32 0.0, %v227
  %v229 = vpop.f32.mrf.mxu0
  %v230 = vadd.f32 0.0, %v229
  %231 = vmatmul.bf16.gmra.mxu0 %v127
  %v232 = vpop.f32.mrf.mxu0
  %v233 = vadd.f32 0.0, %v232
  %v234 = vpop.f32.mrf.mxu0
  %v235 = vadd.f32 0.0, %v234
  %236 = vmatmul.bf16.gmra.mxu0 %v128
  %v237 = vpop.f32.mrf.mxu0
  %v238 = vadd.f32 0.0, %v237
  %v239 = vpop.f32.mrf.mxu0
  %v240 = vadd.f32 0.0, %v239
  %241 = vmatmul.bf16.gmra.mxu0 %v129
  %v242 = vpop.f32.mrf.mxu0
  %v243 = vadd.f32 0.0, %v242
  %v244 = vpop.f32.mrf.mxu0
  %v245 = vadd.f32 0.0, %v244
  %246 = vmatmul.bf16.gmra.mxu0 %v130
  %v247 = vpop.f32.mrf.mxu0
  %v248 = vadd.f32 0.0, %v247
  %v249 = vpop.f32.mrf.mxu0
  %v250 = vadd.f32 0.0, %v249
  %251 = vmatmul.bf16.gmra.mxu0 %v131
  %v252 = vpop.f32.mrf.mxu0
  %v253 = vadd.f32 0.0, %v252
  %v254 = vpop.f32.mrf.mxu0
  %v255 = vadd.f32 0.0, %v254
  %256 = vmatmul.bf16.gmra.mxu0 %v132
  %v257 = vpop.f32.mrf.mxu0
  %v258 = vadd.f32 0.0, %v257
  %v259 = vpop.f32.mrf.mxu0
  %v260 = vadd.f32 0.0, %v259
  %261 = vmatmul.bf16.gmra.mxu0 %v133
  %v262 = vpop.f32.mrf.mxu0
  %v263 = vadd.f32 0.0, %v262
  %v264 = vpop.f32.mrf.mxu0
  %v265 = vadd.f32 0.0, %v264
  %266 = vmatmul.bf16.gmra.mxu0 %v134
  %v267 = vpop.f32.mrf.mxu0
  %v268 = vadd.f32 0.0, %v267
  %v269 = vpop.f32.mrf.mxu0
  %v270 = vadd.f32 0.0, %v269
  %271 = vmatmul.bf16.gmra.mxu0 %v135
  %v272 = vpop.f32.mrf.mxu0
  %v273 = vadd.f32 0.0, %v272
  %v274 = vpop.f32.mrf.mxu0
  %v275 = vadd.f32 0.0, %v274
  %276 = vmatmul.bf16.gmra.mxu0 %v136
  %v277 = vpop.f32.mrf.mxu0
  %v278 = vadd.f32 0.0, %v277
  %v279 = vpop.f32.mrf.mxu0
  %v280 = vadd.f32 0.0, %v279
  %281 = vmatmul.bf16.gmra.mxu0 %v137
  %v282 = vpop.f32.mrf.mxu0
  %v283 = vadd.f32 0.0, %v282
  %v284 = vpop.f32.mrf.mxu0
  %v285 = vadd.f32 0.0, %v284
  %286 = vmatmul.bf16.gmra.mxu0 %v138
  %v287 = vpop.f32.mrf.mxu0
  %v288 = vadd.f32 0.0, %v287
  %v289 = vpop.f32.mrf.mxu0
  %v290 = vadd.f32 0.0, %v289
  %291 = vdwg.mxu0
  %v292 = vpack.c.bf16 %v213, %v213
  %v293 = vpack.c.bf16 %v215, %v215
  %v294 = vpack.c.bf16 %v218, %v218
  %v295 = vpack.c.bf16 %v220, %v220
  %v296 = vpack.c.bf16 %v223, %v223
  %v297 = vpack.c.bf16 %v225, %v225
  %v298 = vpack.c.bf16 %v228, %v228
  %v299 = vpack.c.bf16 %v230, %v230
  %v300 = vpack.c.bf16 %v233, %v233
  %v301 = vpack.c.bf16 %v235, %v235
  %v302 = vpack.c.bf16 %v238, %v238
  %v303 = vpack.c.bf16 %v240, %v240
  %v304 = vpack.c.bf16 %v243, %v243
  %v305 = vpack.c.bf16 %v245, %v245
  %v306 = vpack.c.bf16 %v248, %v248
  %v307 = vpack.c.bf16 %v250, %v250
  %v308 = vpack.c.bf16 %v253, %v253
  %v309 = vpack.c.bf16 %v255, %v255
  %v310 = vpack.c.bf16 %v258, %v258
  %v311 = vpack.c.bf16 %v260, %v260
  %v312 = vpack.c.bf16 %v263, %v263
  %v313 = vpack.c.bf16 %v265, %v265
  %v314 = vpack.c.bf16 %v268, %v268
  %v315 = vpack.c.bf16 %v270, %v270
  %v316 = vpack.c.bf16 %v273, %v273
  %v317 = vpack.c.bf16 %v275, %v275
  %v318 = vpack.c.bf16 %v278, %v278
  %v319 = vpack.c.bf16 %v280, %v280
  %v320 = vpack.c.bf16 %v283, %v283
  %v321 = vpack.c.bf16 %v285, %v285
  %v322 = vpack.c.bf16 %v288, %v288
  %v323 = vpack.c.bf16 %v290, %v290
  %324 = vst [vmem:[%s2] sm:$0xf] %v292
  %325 = vst [vmem:[%s2 + $0x4] sm:$0xf] %v293
  %326 = vst [vmem:[%s2 + $0x8] sm:$0xf] %v294
  %327 = vst [vmem:[%s2 + $0xc] sm:$0xf] %v295
  %328 = vst [vmem:[%s2 + $0x10] sm:$0xf] %v296
  %329 = vst [vmem:[%s2 + $0x14] sm:$0xf] %v297
  %330 = vst [vmem:[%s2 + $0x18] sm:$0xf] %v298
  %331 = vst [vmem:[%s2 + $0x1c] sm:$0xf] %v299
  %332 = vst [vmem:[%s2 + $0x20] sm:$0xf] %v300
  %333 = vst [vmem:[%s2 + $0x24] sm:$0xf] %v301
  %334 = vst [vmem:[%s2 + $0x28] sm:$0xf] %v302
  %335 = vst [vmem:[%s2 + $0x2c] sm:$0xf] %v303
  %336 = vst [vmem:[%s2 + $0x30] sm:$0xf] %v304
  %337 = vst [vmem:[%s2 + $0x34] sm:$0xf] %v305
  %338 = vst [vmem:[%s2 + $0x38] sm:$0xf] %v306
  %339 = vst [vmem:[%s2 + $0x3c] sm:$0xf] %v307
  %340 = vst [vmem:[%s2 + $0x40] sm:$0xf] %v308
  %341 = vst [vmem:[%s2 + $0x44] sm:$0xf] %v309
  %342 = vst [vmem:[%s2 + $0x48] sm:$0xf] %v310
  %343 = vst [vmem:[%s2 + $0x4c] sm:$0xf] %v311
  %344 = vst [vmem:[%s2 + $0x50] sm:$0xf] %v312
  %345 = vst [vmem:[%s2 + $0x54] sm:$0xf] %v313
  %346 = vst [vmem:[%s2 + $0x58] sm:$0xf] %v314
  %347 = vst [vmem:[%s2 + $0x5c] sm:$0xf] %v315
  %348 = vst [vmem:[%s2 + $0x60] sm:$0xf] %v316
  %349 = vst [vmem:[%s2 + $0x64] sm:$0xf] %v317
  %350 = vst [vmem:[%s2 + $0x68] sm:$0xf] %v318
  %351 = vst [vmem:[%s2 + $0x6c] sm:$0xf] %v319
  %352 = vst [vmem:[%s2 + $0x70] sm:$0xf] %v320
  %353 = vst [vmem:[%s2 + $0x74] sm:$0xf] %v321
  %354 = vst [vmem:[%s2 + $0x78] sm:$0xf] %v322
  %355 = vst [vmem:[%s2 + $0x7c] sm:$0xf] %v323
  // Predicated region
  $region10: #{gnn_forward.4} parent=0 // pred_check
    _
  $region11: #{gnn_forward.4} parent=0 // pred_check_branch
    %357 = sbr.rel (0) target = $region13
  $region12: #{gnn_forward.4} parent=0 // pred_region
    _
  $region13: #{gnn_forward.4} parent=0 // pred_fallthru
    _
  // Predicated region
  $region14: #{gnn_forward.4} parent=0 // pred_check
    _
  $region15: #{gnn_forward.4} parent=0 // pred_check_branch
    %359 = sbr.rel (0) target = $region17
  $region16: #{gnn_forward.4} parent=0 // pred_region
    _
  $region17: #{gnn_forward.4} parent=0 // pred_fallthru
    _

// kernel: gnn_forward.7
$region0: #{gnn_forward.7}
  #allocation0 [shape = 'u32[]', space=smem, size = 0x4, offset = 0x4, fixed_abs, tag = 'smem constant byte address 0x4 - core index']
  #allocation1 [shape = 'u32[72,128]{1,0:T(1,128)}', space=vmem, size = 0x9000, scoped, tag = 'internal scratch']
  #allocation2 [shape = 'f32[8,128]{1,0:T(8,128)}', space=vmem, size = 0x1000, scoped, tag = 'scratch operand']
  %s0 = inlined_call_operand.vmem [shape: f32[8,256], index: 0, kind: input, shape index: {}]
  %s1 = inlined_call_operand.vmem [shape: bf16[256,128], index: 1, kind: input, shape index: {}]
  %s2 = inlined_call_operand.vmem [shape: f32[128,128], index: 2, kind: input, shape index: {}]
  %s3 = inlined_call_operand.vmem [shape: f32[1,128], index: 3, kind: input, shape index: {}]
  %s4 = inlined_call_operand.vmem [shape: f32[8,128], index: 4, kind: output, shape index: {}]
  %s5 = sld [smem:[#allocation0]]
  $region34: #{gnn_forward.7} parent=0
    _
  %s7 = ssub.s32 1, %s5
  %s8 = scalar_select 0, %s7, %s5
  // Predicated region
  $region2: #{gnn_forward.7} parent=0 // pred_check
    _
  $region3: #{gnn_forward.7} parent=0 // pred_check_branch
    %10 = sbr.rel (0) target = $region5
  $region4: #{gnn_forward.7} parent=0 // pred_region
    _
  $region5: #{gnn_forward.7} parent=0 // pred_fallthru
    _
  // Predicated region
  $region6: #{gnn_forward.7} parent=0 // pred_check
    _
  $region7: #{gnn_forward.7} parent=0 // pred_check_branch
    %12 = sbr.rel (0) target = $region9
  $region8: #{gnn_forward.7} parent=0 // pred_region
    _
  $region9: #{gnn_forward.7} parent=0 // pred_fallthru
    _
  // Predicated region
  $region10: #{gnn_forward.7} parent=0 // pred_check
    _
  $region11: #{gnn_forward.7} parent=0 // pred_check_branch
    %14 = sbr.rel (0) target = $region13
  $region12: #{gnn_forward.7} parent=0 // pred_region
    _
  $region13: #{gnn_forward.7} parent=0 // pred_fallthru
    _
  // Predicated region
  $region14: #{gnn_forward.7} parent=0 // pred_check
    _
  $region15: #{gnn_forward.7} parent=0 // pred_check_branch
    %16 = sbr.rel (0) target = $region17
  $region16: #{gnn_forward.7} parent=0 // pred_region
    _
  $region17: #{gnn_forward.7} parent=0 // pred_fallthru
    _
  %p17 = scmp.eq.s32.totalorder 0, 0
  // Predicated region
  $region18: #{gnn_forward.7} parent=0 // pred_check
    %p18 = pneg %p17
  $region19: #{gnn_forward.7} parent=0 // pred_check_branch
    %20 = sbr.rel (%p18) target = $region21
  $region20: #{gnn_forward.7} parent=0 // pred_region
    %21 = vst [vmem:[#allocation2] sm:$0xff] 0.0
  $region21: #{gnn_forward.7} parent=0 // pred_fallthru
    _
  %v22 = vld [vmem:[#allocation2] sm:$0xff]
  %v23 = vld [vmem:[%s0] sm:$0xff]
  %v24 = vld [vmem:[%s0 + $0x8] sm:$0xff]
  %v25 = vld [vmem:[%s1] sm:$0xf]
  %v26 = vld [vmem:[%s1 + $0x4] sm:$0xf]
  %v27 = vld [vmem:[%s1 + $0x8] sm:$0xf]
  %v28 = vld [vmem:[%s1 + $0xc] sm:$0xf]
  %v29 = vld [vmem:[%s1 + $0x10] sm:$0xf]
  %v30 = vld [vmem:[%s1 + $0x14] sm:$0xf]
  %v31 = vld [vmem:[%s1 + $0x18] sm:$0xf]
  %v32 = vld [vmem:[%s1 + $0x1c] sm:$0xf]
  %v33 = vld [vmem:[%s1 + $0x20] sm:$0xf]
  %v34 = vld [vmem:[%s1 + $0x24] sm:$0xf]
  %v35 = vld [vmem:[%s1 + $0x28] sm:$0xf]
  %v36 = vld [vmem:[%s1 + $0x2c] sm:$0xf]
  %v37 = vld [vmem:[%s1 + $0x30] sm:$0xf]
  %v38 = vld [vmem:[%s1 + $0x34] sm:$0xf]
  %v39 = vld [vmem:[%s1 + $0x38] sm:$0xf]
  %v40 = vld [vmem:[%s1 + $0x3c] sm:$0xf]
  %v41 = vld [vmem:[%s1 + $0x40] sm:$0xf]
  %v42 = vld [vmem:[%s1 + $0x44] sm:$0xf]
  %v43 = vld [vmem:[%s1 + $0x48] sm:$0xf]
  %v44 = vld [vmem:[%s1 + $0x4c] sm:$0xf]
  %v45 = vld [vmem:[%s1 + $0x50] sm:$0xf]
  %v46 = vld [vmem:[%s1 + $0x54] sm:$0xf]
  %v47 = vld [vmem:[%s1 + $0x58] sm:$0xf]
  %v48 = vld [vmem:[%s1 + $0x5c] sm:$0xf]
  %v49 = vld [vmem:[%s1 + $0x60] sm:$0xf]
  %v50 = vld [vmem:[%s1 + $0x64] sm:$0xf]
  %v51 = vld [vmem:[%s1 + $0x68] sm:$0xf]
  %v52 = vld [vmem:[%s1 + $0x6c] sm:$0xf]
  %v53 = vld [vmem:[%s1 + $0x70] sm:$0xf]
  %v54 = vld [vmem:[%s1 + $0x74] sm:$0xf]
  %v55 = vld [vmem:[%s1 + $0x78] sm:$0xf]
  %v56 = vld [vmem:[%s1 + $0x7c] sm:$0xf]
  %v57 = vunpack.c.l.bf16 %v25
  %v58 = vunpack.c.l.bf16 %v26
  %v59 = vunpack.c.l.bf16 %v27
  %v60 = vunpack.c.l.bf16 %v28
  %v61 = vunpack.c.l.bf16 %v29
  %v62 = vunpack.c.l.bf16 %v30
  %v63 = vunpack.c.l.bf16 %v31
  %v64 = vunpack.c.l.bf16 %v32
  %v65 = vunpack.c.l.bf16 %v33
  %v66 = vunpack.c.l.bf16 %v34
  %v67 = vunpack.c.l.bf16 %v35
  %v68 = vunpack.c.l.bf16 %v36
  %v69 = vunpack.c.l.bf16 %v37
  %v70 = vunpack.c.l.bf16 %v38
  %v71 = vunpack.c.l.bf16 %v39
  %v72 = vunpack.c.l.bf16 %v40
  %v73 = vunpack.c.l.bf16 %v41
  %v74 = vunpack.c.l.bf16 %v42
  %v75 = vunpack.c.l.bf16 %v43
  %v76 = vunpack.c.l.bf16 %v44
  %v77 = vunpack.c.l.bf16 %v45
  %v78 = vunpack.c.l.bf16 %v46
  %v79 = vunpack.c.l.bf16 %v47
  %v80 = vunpack.c.l.bf16 %v48
  %v81 = vunpack.c.l.bf16 %v49
  %v82 = vunpack.c.l.bf16 %v50
  %v83 = vunpack.c.l.bf16 %v51
  %v84 = vunpack.c.l.bf16 %v52
  %v85 = vunpack.c.l.bf16 %v53
  %v86 = vunpack.c.l.bf16 %v54
  %v87 = vunpack.c.l.bf16 %v55
  %v88 = vunpack.c.l.bf16 %v56
  %89 = vmatpush.msra.mxu0 %v72
  %90 = vmatpush.msra.mxu0 %v71
  %91 = vmatpush.msra.mxu0 %v70
  %92 = vmatpush.msra.mxu0 %v69
  %93 = vmatpush.msra.mxu0 %v68
  %94 = vmatpush.msra.mxu0 %v67
  %95 = vmatpush.msra.mxu0 %v66
  %96 = vmatpush.msra.mxu0 %v65
  %97 = vmatpush.msra.mxu0 %v64
  %98 = vmatpush.msra.mxu0 %v63
  %99 = vmatpush.msra.mxu0 %v62
  %100 = vmatpush.msra.mxu0 %v61
  %101 = vmatpush.msra.mxu0 %v60
  %102 = vmatpush.msra.mxu0 %v59
  %103 = vmatpush.msra.mxu0 %v58
  %104 = vmatpush.msra.mxu0 %v57
  %105 = vmatmul.f32.gmra.mxu0 %v23
  %v106 = vpop.f32.mrf.mxu0
  %v107 = vadd.f32 0.0, %v106
  %108 = vdwg.mxu0
  %109 = vmatpush.msra.mxu0 %v88
  %110 = vmatpush.msra.mxu0 %v87
  %111 = vmatpush.msra.mxu0 %v86
  %112 = vmatpush.msra.mxu0 %v85
  %113 = vmatpush.msra.mxu0 %v84
  %114 = vmatpush.msra.mxu0 %v83
  %115 = vmatpush.msra.mxu0 %v82
  %116 = vmatpush.msra.mxu0 %v81
  %117 = vmatpush.msra.mxu0 %v80
  %118 = vmatpush.msra.mxu0 %v79
  %119 = vmatpush.msra.mxu0 %v78
  %120 = vmatpush.msra.mxu0 %v77
  %121 = vmatpush.msra.mxu0 %v76
  %122 = vmatpush.msra.mxu0 %v75
  %123 = vmatpush.msra.mxu0 %v74
  %124 = vmatpush.msra.mxu0 %v73
  %125 = vmatmul.f32.gmra.mxu0 %v24
  %v126 = vpop.f32.mrf.mxu0
  %v127 = vadd.f32 %v107, %v126
  %128 = vdwg.mxu0
  %v129 = vadd.f32 %v22, %v127
  %130 = vst [vmem:[#allocation2] sm:$0xff] %v129
  // Predicated region
  $region22: #{gnn_forward.7} parent=0 // pred_check
    %p131 = pneg %p17
  $region23: #{gnn_forward.7} parent=0 // pred_check_branch
    %133 = sbr.rel (%p131) target = $region25
  $region24: #{gnn_forward.7} parent=0 // pred_region
    %v134 = vld [vmem:[#allocation2] sm:$0xff]
    %v135 = vld [vmem:[%s2] sm:$0xff]
    %v136 = vld [vmem:[%s2 + $0x8] sm:$0xff]
    %v137 = vld [vmem:[%s2 + $0x10] sm:$0xff]
    %v138 = vld [vmem:[%s2 + $0x18] sm:$0xff]
    %v139 = vld [vmem:[%s2 + $0x20] sm:$0xff]
    %v140 = vld [vmem:[%s2 + $0x28] sm:$0xff]
    %v141 = vld [vmem:[%s2 + $0x30] sm:$0xff]
    %v142 = vld [vmem:[%s2 + $0x38] sm:$0xff]
    %v143 = vld [vmem:[%s2 + $0x40] sm:$0xff]
    %v144 = vld [vmem:[%s2 + $0x48] sm:$0xff]
    %v145 = vld [vmem:[%s2 + $0x50] sm:$0xff]
    %v146 = vld [vmem:[%s2 + $0x58] sm:$0xff]
    %v147 = vld [vmem:[%s2 + $0x60] sm:$0xff]
    %v148 = vld [vmem:[%s2 + $0x68] sm:$0xff]
    %v149 = vld [vmem:[%s2 + $0x70] sm:$0xff]
    %v150 = vld [vmem:[%s2 + $0x78] sm:$0xff]
    %v151 = vld [vmem:[%s3] sm:$0x1]
    %v153 = vperm.slane %v151, 0
    %155 = vmatpush.msra.mxu0 %v150
    %156 = vmatpush.msra.mxu0 %v149
    %157 = vmatpush.msra.mxu0 %v148
    %158 = vmatpush.msra.mxu0 %v147
    %159 = vmatpush.msra.mxu0 %v146
    %160 = vmatpush.msra.mxu0 %v145
    %161 = vmatpush.msra.mxu0 %v144
    %162 = vmatpush.msra.mxu0 %v143
    %163 = vmatpush.msra.mxu0 %v142
    %164 = vmatpush.msra.mxu0 %v141
    %165 = vmatpush.msra.mxu0 %v140
    %166 = vmatpush.msra.mxu0 %v139
    %167 = vmatpush.msra.mxu0 %v138
    %168 = vmatpush.msra.mxu0 %v137
    %169 = vmatpush.msra.mxu0 %v136
    %170 = vmatpush.msra.mxu0 %v135
    %171 = vmatmul.f32.gmra.mxu0 %v134
    %v172 = vpop.f32.mrf.mxu0
    %v173 = vadd.f32 %v153, %v172
    %174 = vdwg.mxu0
    %175 = vst [vmem:[%s4] sm:$0xff] %v173
  $region25: #{gnn_forward.7} parent=0 // pred_fallthru
    _
  // Predicated region
  $region26: #{gnn_forward.7} parent=0 // pred_check
    _
  $region27: #{gnn_forward.7} parent=0 // pred_check_branch
    %177 = sbr.rel (0) target = $region29
  $region28: #{gnn_forward.7} parent=0 // pred_region
    _
  $region29: #{gnn_forward.7} parent=0 // pred_fallthru
    _
  // Predicated region
  $region30: #{gnn_forward.7} parent=0 // pred_check
    _
  $region31: #{gnn_forward.7} parent=0 // pred_check_branch
    %179 = sbr.rel (0) target = $region33
  $region32: #{gnn_forward.7} parent=0 // pred_region
    _
  $region33: #{gnn_forward.7} parent=0 // pred_fallthru
    _

// kernel: gnn_forward.6
$region0: #{gnn_forward.6}
  #allocation0 [shape = 'u32[]', space=smem, size = 0x4, offset = 0x4, fixed_abs, tag = 'smem constant byte address 0x4 - core index']
  #allocation1 [shape = 'u32[72,128]{1,0:T(1,128)}', space=vmem, size = 0x9000, scoped, tag = 'internal scratch']
  #allocation2 [shape = 'f32[256,128]{1,0:T(8,128)}', space=vmem, size = 0x20000, scoped, tag = 'scratch operand']
  %s0 = inlined_call_operand.vmem [shape: bf16[256,256], index: 0, kind: input, shape index: {}]
  %s1 = inlined_call_operand.vmem [shape: bf16[256,128], index: 1, kind: input, shape index: {}]
  %s2 = inlined_call_operand.vmem [shape: f32[1,128], index: 2, kind: input, shape index: {}]
  %s3 = inlined_call_operand.vmem [shape: bf16[256,128], index: 3, kind: output, shape index: {}]
  %s4 = sld [smem:[#allocation0]]
  $region30: #{gnn_forward.6} parent=0
    _
  %s6 = ssub.s32 1, %s4
  %s7 = scalar_select 0, %s6, %s4
  // Predicated region
  $region2: #{gnn_forward.6} parent=0 // pred_check
    _
  $region3: #{gnn_forward.6} parent=0 // pred_check_branch
    %9 = sbr.rel (0) target = $region5
  $region4: #{gnn_forward.6} parent=0 // pred_region
    _
  $region5: #{gnn_forward.6} parent=0 // pred_fallthru
    _
  // Predicated region
  $region6: #{gnn_forward.6} parent=0 // pred_check
    _
  $region7: #{gnn_forward.6} parent=0 // pred_check_branch
    %11 = sbr.rel (0) target = $region9
  $region8: #{gnn_forward.6} parent=0 // pred_region
    _
  $region9: #{gnn_forward.6} parent=0 // pred_fallthru
    _
  // Predicated region
  $region10: #{gnn_forward.6} parent=0 // pred_check
    _
  $region11: #{gnn_forward.6} parent=0 // pred_check_branch
    %13 = sbr.rel (0) target = $region13
  $region12: #{gnn_forward.6} parent=0 // pred_region
    _
  $region13: #{gnn_forward.6} parent=0 // pred_fallthru
    _
  %p14 = scmp.eq.s32.totalorder 0, 0
  // Predicated region
  $region14: #{gnn_forward.6} parent=0 // pred_check
    %p15 = pneg %p14
  $region15: #{gnn_forward.6} parent=0 // pred_check_branch
    %17 = sbr.rel (%p15) target = $region17
  $region16: #{gnn_forward.6} parent=0 // pred_region
    %18 = vst [vmem:[#allocation2] sm:$0xff] 0.0
    %19 = vst [vmem:[#allocation2 + $0x8] sm:$0xff] 0.0
    %20 = vst [vmem:[#allocation2 + $0x10] sm:$0xff] 0.0
    %21 = vst [vmem:[#allocation2 + $0x18] sm:$0xff] 0.0
    %22 = vst [vmem:[#allocation2 + $0x20] sm:$0xff] 0.0
    %23 = vst [vmem:[#allocation2 + $0x28] sm:$0xff] 0.0
    %24 = vst [vmem:[#allocation2 + $0x30] sm:$0xff] 0.0
    %25 = vst [vmem:[#allocation2 + $0x38] sm:$0xff] 0.0
    %26 = vst [vmem:[#allocation2 + $0x40] sm:$0xff] 0.0
    %27 = vst [vmem:[#allocation2 + $0x48] sm:$0xff] 0.0
    %28 = vst [vmem:[#allocation2 + $0x50] sm:$0xff] 0.0
    %29 = vst [vmem:[#allocation2 + $0x58] sm:$0xff] 0.0
    %30 = vst [vmem:[#allocation2 + $0x60] sm:$0xff] 0.0
    %31 = vst [vmem:[#allocation2 + $0x68] sm:$0xff] 0.0
    %32 = vst [vmem:[#allocation2 + $0x70] sm:$0xff] 0.0
    %33 = vst [vmem:[#allocation2 + $0x78] sm:$0xff] 0.0
    %34 = vst [vmem:[#allocation2 + $0x80] sm:$0xff] 0.0
    %35 = vst [vmem:[#allocation2 + $0x88] sm:$0xff] 0.0
    %36 = vst [vmem:[#allocation2 + $0x90] sm:$0xff] 0.0
    %37 = vst [vmem:[#allocation2 + $0x98] sm:$0xff] 0.0
    %38 = vst [vmem:[#allocation2 + $0xa0] sm:$0xff] 0.0
    %39 = vst [vmem:[#allocation2 + $0xa8] sm:$0xff] 0.0
    %40 = vst [vmem:[#allocation2 + $0xb0] sm:$0xff] 0.0
    %41 = vst [vmem:[#allocation2 + $0xb8] sm:$0xff] 0.0
    %42 = vst [vmem:[#allocation2 + $0xc0] sm:$0xff] 0.0
    %43 = vst [vmem:[#allocation2 + $0xc8] sm:$0xff] 0.0
    %44 = vst [vmem:[#allocation2 + $0xd0] sm:$0xff] 0.0
    %45 = vst [vmem:[#allocation2 + $0xd8] sm:$0xff] 0.0
    %46 = vst [vmem:[#allocation2 + $0xe0] sm:$0xff] 0.0
    %47 = vst [vmem:[#allocation2 + $0xe8] sm:$0xff] 0.0
    %48 = vst [vmem:[#allocation2 + $0xf0] sm:$0xff] 0.0
    %49 = vst [vmem:[#allocation2 + $0xf8] sm:$0xff] 0.0
  $region17: #{gnn_forward.6} parent=0 // pred_fallthru
    _
  %s50 = smul.u32 0, 256
  %s51 = sshra.s32 %s50, 3
  %s52 = sand.u32 %s50, 7
  %s53 = smul.addr %s51, 4
  %s54 = scalar_lea.vmem %s1, %s53
  %v55 = vld [vmem:[%s54] sm:$0xf]
  %v56 = vld [vmem:[%s54 + $0x4] sm:$0xf]
  %v57 = vld [vmem:[%s54 + $0x8] sm:$0xf]
  %v58 = vld [vmem:[%s54 + $0xc] sm:$0xf]
  %v59 = vld [vmem:[%s54 + $0x10] sm:$0xf]
  %v60 = vld [vmem:[%s54 + $0x14] sm:$0xf]
  %v61 = vld [vmem:[%s54 + $0x18] sm:$0xf]
  %v62 = vld [vmem:[%s54 + $0x1c] sm:$0xf]
  %v63 = vld [vmem:[%s54 + $0x20] sm:$0xf]
  %v64 = vld [vmem:[%s54 + $0x24] sm:$0xf]
  %v65 = vld [vmem:[%s54 + $0x28] sm:$0xf]
  %v66 = vld [vmem:[%s54 + $0x2c] sm:$0xf]
  %v67 = vld [vmem:[%s54 + $0x30] sm:$0xf]
  %v68 = vld [vmem:[%s54 + $0x34] sm:$0xf]
  %v69 = vld [vmem:[%s54 + $0x38] sm:$0xf]
  %v70 = vld [vmem:[%s54 + $0x3c] sm:$0xf]
  %v71 = vld [vmem:[%s54 + $0x40] sm:$0xf]
  %v72 = vld [vmem:[%s54 + $0x44] sm:$0xf]
  %v73 = vld [vmem:[%s54 + $0x48] sm:$0xf]
  %v74 = vld [vmem:[%s54 + $0x4c] sm:$0xf]
  %v75 = vld [vmem:[%s54 + $0x50] sm:$0xf]
  %v76 = vld [vmem:[%s54 + $0x54] sm:$0xf]
  %v77 = vld [vmem:[%s54 + $0x58] sm:$0xf]
  %v78 = vld [vmem:[%s54 + $0x5c] sm:$0xf]
  %v79 = vld [vmem:[%s54 + $0x60] sm:$0xf]
  %v80 = vld [vmem:[%s54 + $0x64] sm:$0xf]
  %v81 = vld [vmem:[%s54 + $0x68] sm:$0xf]
  %v82 = vld [vmem:[%s54 + $0x6c] sm:$0xf]
  %v83 = vld [vmem:[%s54 + $0x70] sm:$0xf]
  %v84 = vld [vmem:[%s54 + $0x74] sm:$0xf]
  %v85 = vld [vmem:[%s54 + $0x78] sm:$0xf]
  %v86 = vld [vmem:[%s54 + $0x7c] sm:$0xf]
  %v87 = vld [vmem:[#allocation2] sm:$0xff]
  %v88 = vld [vmem:[#allocation2 + $0x8] sm:$0xff]
  %v89 = vld [vmem:[#allocation2 + $0x10] sm:$0xff]
  %v90 = vld [vmem:[#allocation2 + $0x18] sm:$0xff]
  %v91 = vld [vmem:[#allocation2 + $0x20] sm:$0xff]
  %v92 = vld [vmem:[#allocation2 + $0x28] sm:$0xff]
  %v93 = vld [vmem:[#allocation2 + $0x30] sm:$0xff]
  %v94 = vld [vmem:[#allocation2 + $0x38] sm:$0xff]
  %v95 = vld [vmem:[#allocation2 + $0x40] sm:$0xff]
  %v96 = vld [vmem:[#allocation2 + $0x48] sm:$0xff]
  %v97 = vld [vmem:[#allocation2 + $0x50] sm:$0xff]
  %v98 = vld [vmem:[#allocation2 + $0x58] sm:$0xff]
  %v99 = vld [vmem:[#allocation2 + $0x60] sm:$0xff]
  %v100 = vld [vmem:[#allocation2 + $0x68] sm:$0xff]
  %v101 = vld [vmem:[#allocation2 + $0x70] sm:$0xff]
  %v102 = vld [vmem:[#allocation2 + $0x78] sm:$0xff]
  %v103 = vld [vmem:[#allocation2 + $0x80] sm:$0xff]
  %v104 = vld [vmem:[#allocation2 + $0x88] sm:$0xff]
  %v105 = vld [vmem:[#allocation2 + $0x90] sm:$0xff]
  %v106 = vld [vmem:[#allocation2 + $0x98] sm:$0xff]
  %v107 = vld [vmem:[#allocation2 + $0xa0] sm:$0xff]
  %v108 = vld [vmem:[#allocation2 + $0xa8] sm:$0xff]
  %v109 = vld [vmem:[#allocation2 + $0xb0] sm:$0xff]
  %v110 = vld [vmem:[#allocation2 + $0xb8] sm:$0xff]
  %v111 = vld [vmem:[#allocation2 + $0xc0] sm:$0xff]
  %v112 = vld [vmem:[#allocation2 + $0xc8] sm:$0xff]
  %v113 = vld [vmem:[#allocation2 + $0xd0] sm:$0xff]
  %v114 = vld [vmem:[#allocation2 + $0xd8] sm:$0xff]
  %v115 = vld [vmem:[#allocation2 + $0xe0] sm:$0xff]
  %v116 = vld [vmem:[#allocation2 + $0xe8] sm:$0xff]
  %v117 = vld [vmem:[#allocation2 + $0xf0] sm:$0xff]
  %v118 = vld [vmem:[#allocation2 + $0xf8] sm:$0xff]
  %v119 = vld [vmem:[%s0] sm:$0xff]
  %v120 = vld [vmem:[%s0 + $0x8] sm:$0xff]
  %v121 = vld [vmem:[%s0 + $0x10] sm:$0xff]
  %v122 = vld [vmem:[%s0 + $0x18] sm:$0xff]
  %v123 = vld [vmem:[%s0 + $0x20] sm:$0xff]
  %v124 = vld [vmem:[%s0 + $0x28] sm:$0xff]
  %v125 = vld [vmem:[%s0 + $0x30] sm:$0xff]
  %v126 = vld [vmem:[%s0 + $0x38] sm:$0xff]
  %v127 = vld [vmem:[%s0 + $0x40] sm:$0xff]
  %v128 = vld [vmem:[%s0 + $0x48] sm:$0xff]
  %v129 = vld [vmem:[%s0 + $0x50] sm:$0xff]
  %v130 = vld [vmem:[%s0 + $0x58] sm:$0xff]
  %v131 = vld [vmem:[%s0 + $0x60] sm:$0xff]
  %v132 = vld [vmem:[%s0 + $0x68] sm:$0xff]
  %v133 = vld [vmem:[%s0 + $0x70] sm:$0xff]
  %v134 = vld [vmem:[%s0 + $0x78] sm:$0xff]
  %v135 = vld [vmem:[%s0 + $0x80] sm:$0xff]
  %v136 = vld [vmem:[%s0 + $0x88] sm:$0xff]
  %v137 = vld [vmem:[%s0 + $0x90] sm:$0xff]
  %v138 = vld [vmem:[%s0 + $0x98] sm:$0xff]
  %v139 = vld [vmem:[%s0 + $0xa0] sm:$0xff]
  %v140 = vld [vmem:[%s0 + $0xa8] sm:$0xff]
  %v141 = vld [vmem:[%s0 + $0xb0] sm:$0xff]
  %v142 = vld [vmem:[%s0 + $0xb8] sm:$0xff]
  %v143 = vld [vmem:[%s0 + $0xc0] sm:$0xff]
  %v144 = vld [vmem:[%s0 + $0xc8] sm:$0xff]
  %v145 = vld [vmem:[%s0 + $0xd0] sm:$0xff]
  %v146 = vld [vmem:[%s0 + $0xd8] sm:$0xff]
  %v147 = vld [vmem:[%s0 + $0xe0] sm:$0xff]
  %v148 = vld [vmem:[%s0 + $0xe8] sm:$0xff]
  %v149 = vld [vmem:[%s0 + $0xf0] sm:$0xff]
  %v150 = vld [vmem:[%s0 + $0xf8] sm:$0xff]
  %v183 = vunpack.c.l.b16 %v119
  %v184 = vunpack.c.h.b16 %v119
  %v185 = vunpack.c.l.b16 %v120
  %v186 = vunpack.c.h.b16 %v120
  %v187 = vunpack.c.l.b16 %v121
  %v188 = vunpack.c.h.b16 %v121
  %v189 = vunpack.c.l.b16 %v122
  %v190 = vunpack.c.h.b16 %v122
  %v191 = vunpack.c.l.b16 %v123
  %v192 = vunpack.c.h.b16 %v123
  %v193 = vunpack.c.l.b16 %v124
  %v194 = vunpack.c.h.b16 %v124
  %v195 = vunpack.c.l.b16 %v125
  %v196 = vunpack.c.h.b16 %v125
  %v197 = vunpack.c.l.b16 %v126
  %v198 = vunpack.c.h.b16 %v126
  %v199 = vunpack.c.l.b16 %v127
  %v200 = vunpack.c.h.b16 %v127
  %v201 = vunpack.c.l.b16 %v128
  %v202 = vunpack.c.h.b16 %v128
  %v203 = vunpack.c.l.b16 %v129
  %v204 = vunpack.c.h.b16 %v129
  %v205 = vunpack.c.l.b16 %v130
  %v206 = vunpack.c.h.b16 %v130
  %v207 = vunpack.c.l.b16 %v131
  %v208 = vunpack.c.h.b16 %v131
  %v209 = vunpack.c.l.b16 %v132
  %v210 = vunpack.c.h.b16 %v132
  %v211 = vunpack.c.l.b16 %v133
  %v212 = vunpack.c.h.b16 %v133
  %v213 = vunpack.c.l.b16 %v134
  %v214 = vunpack.c.h.b16 %v134
  %v215 = vunpack.c.l.b16 %v135
  %v216 = vunpack.c.h.b16 %v135
  %v217 = vunpack.c.l.b16 %v136
  %v218 = vunpack.c.h.b16 %v136
  %v219 = vunpack.c.l.b16 %v137
  %v220 = vunpack.c.h.b16 %v137
  %v221 = vunpack.c.l.b16 %v138
  %v222 = vunpack.c.h.b16 %v138
  %v223 = vunpack.c.l.b16 %v139
  %v224 = vunpack.c.h.b16 %v139
  %v225 = vunpack.c.l.b16 %v140
  %v226 = vunpack.c.h.b16 %v140
  %v227 = vunpack.c.l.b16 %v141
  %v228 = vunpack.c.h.b16 %v141
  %v229 = vunpack.c.l.b16 %v142
  %v230 = vunpack.c.h.b16 %v142
  %v231 = vunpack.c.l.b16 %v143
  %v232 = vunpack.c.h.b16 %v143
  %v233 = vunpack.c.l.b16 %v144
  %v234 = vunpack.c.h.b16 %v144
  %v235 = vunpack.c.l.b16 %v145
  %v236 = vunpack.c.h.b16 %v145
  %v237 = vunpack.c.l.b16 %v146
  %v238 = vunpack.c.h.b16 %v146
  %v239 = vunpack.c.l.b16 %v147
  %v240 = vunpack.c.h.b16 %v147
  %v241 = vunpack.c.l.b16 %v148
  %v242 = vunpack.c.h.b16 %v148
  %v243 = vunpack.c.l.b16 %v149
  %v244 = vunpack.c.h.b16 %v149
  %v245 = vunpack.c.l.b16 %v150
  %v246 = vunpack.c.h.b16 %v150
  %v247 = vpack.c.b16 %v185, %v183
  %v248 = vpack.c.b16 %v186, %v184
  %v249 = vpack.c.b16 %v189, %v187
  %v250 = vpack.c.b16 %v190, %v188
  %v251 = vpack.c.b16 %v193, %v191
  %v252 = vpack.c.b16 %v194, %v192
  %v253 = vpack.c.b16 %v197, %v195
  %v254 = vpack.c.b16 %v198, %v196
  %v255 = vpack.c.b16 %v201, %v199
  %v256 = vpack.c.b16 %v202, %v200
  %v257 = vpack.c.b16 %v205, %v203
  %v258 = vpack.c.b16 %v206, %v204
  %v259 = vpack.c.b16 %v209, %v207
  %v260 = vpack.c.b16 %v210, %v208
  %v261 = vpack.c.b16 %v213, %v211
  %v262 = vpack.c.b16 %v214, %v212
  %v263 = vpack.c.b16 %v217, %v215
  %v264 = vpack.c.b16 %v218, %v216
  %v265 = vpack.c.b16 %v221, %v219
  %v266 = vpack.c.b16 %v222, %v220
  %v267 = vpack.c.b16 %v225, %v223
  %v268 = vpack.c.b16 %v226, %v224
  %v269 = vpack.c.b16 %v229, %v227
  %v270 = vpack.c.b16 %v230, %v228
  %v271 = vpack.c.b16 %v233, %v231
  %v272 = vpack.c.b16 %v234, %v232
  %v273 = vpack.c.b16 %v237, %v235
  %v274 = vpack.c.b16 %v238, %v236
  %v275 = vpack.c.b16 %v241, %v239
  %v276 = vpack.c.b16 %v242, %v240
  %v277 = vpack.c.b16 %v245, %v243
  %v278 = vpack.c.b16 %v246, %v244
  %v343 = vunpack.c.l.b16 %v55
  %v344 = vunpack.c.l.b16 %v56
  %v345 = vunpack.c.l.b16 %v57
  %v346 = vunpack.c.l.b16 %v58
  %v347 = vunpack.c.l.b16 %v59
  %v348 = vunpack.c.l.b16 %v60
  %v349 = vunpack.c.l.b16 %v61
  %v350 = vunpack.c.l.b16 %v62
  %v351 = vunpack.c.l.b16 %v63
  %v352 = vunpack.c.l.b16 %v64
  %v353 = vunpack.c.l.b16 %v65
  %v354 = vunpack.c.l.b16 %v66
  %v355 = vunpack.c.l.b16 %v67
  %v356 = vunpack.c.l.b16 %v68
  %v357 = vunpack.c.l.b16 %v69
  %v358 = vunpack.c.l.b16 %v70
  %v359 = vunpack.c.l.b16 %v71
  %v360 = vunpack.c.l.b16 %v72
  %v361 = vunpack.c.l.b16 %v73
  %v362 = vunpack.c.l.b16 %v74
  %v363 = vunpack.c.l.b16 %v75
  %v364 = vunpack.c.l.b16 %v76
  %v365 = vunpack.c.l.b16 %v77
  %v366 = vunpack.c.l.b16 %v78
  %v367 = vunpack.c.l.b16 %v79
  %v368 = vunpack.c.l.b16 %v80
  %v369 = vunpack.c.l.b16 %v81
  %v370 = vunpack.c.l.b16 %v82
  %v371 = vunpack.c.l.b16 %v83
  %v372 = vunpack.c.l.b16 %v84
  %v373 = vunpack.c.l.b16 %v85
  %v374 = vunpack.c.l.b16 %v86
  %v375 = vpack.c.b16 %v344, %v343
  %v376 = vpack.c.b16 %v346, %v345
  %v377 = vpack.c.b16 %v348, %v347
  %v378 = vpack.c.b16 %v350, %v349
  %v379 = vpack.c.b16 %v352, %v351
  %v380 = vpack.c.b16 %v354, %v353
  %v381 = vpack.c.b16 %v356, %v355
  %v382 = vpack.c.b16 %v358, %v357
  %v383 = vpack.c.b16 %v360, %v359
  %v384 = vpack.c.b16 %v362, %v361
  %v385 = vpack.c.b16 %v364, %v363
  %v386 = vpack.c.b16 %v366, %v365
  %v387 = vpack.c.b16 %v368, %v367
  %v388 = vpack.c.b16 %v370, %v369
  %v389 = vpack.c.b16 %v372, %v371
  %v390 = vpack.c.b16 %v374, %v373
  %407 = vmatpush.bf16.msra.mxu0 %v382
  %408 = vmatpush.bf16.msra.mxu0 %v381
  %409 = vmatpush.bf16.msra.mxu0 %v380
  %410 = vmatpush.bf16.msra.mxu0 %v379
  %411 = vmatpush.bf16.msra.mxu0 %v378
  %412 = vmatpush.bf16.msra.mxu0 %v377
  %413 = vmatpush.bf16.msra.mxu0 %v376
  %414 = vmatpush.bf16.msra.mxu0 %v375
  %415 = vmatmul.bf16.gmra.mxu0 %v247
  %v416 = vpop.f32.mrf.mxu0
  %v417 = vadd.f32 0.0, %v416
  %v418 = vpop.f32.mrf.mxu0
  %v419 = vadd.f32 0.0, %v418
  %420 = vmatmul.bf16.gmra.mxu0 %v249
  %v421 = vpop.f32.mrf.mxu0
  %v422 = vadd.f32 0.0, %v421
  %v423 = vpop.f32.mrf.mxu0
  %v424 = vadd.f32 0.0, %v423
  %425 = vmatmul.bf16.gmra.mxu0 %v251
  %v426 = vpop.f32.mrf.mxu0
  %v427 = vadd.f32 0.0, %v426
  %v428 = vpop.f32.mrf.mxu0
  %v429 = vadd.f32 0.0, %v428
  %430 = vmatmul.bf16.gmra.mxu0 %v253
  %v431 = vpop.f32.mrf.mxu0
  %v432 = vadd.f32 0.0, %v431
  %v433 = vpop.f32.mrf.mxu0
  %v434 = vadd.f32 0.0, %v433
  %435 = vmatmul.bf16.gmra.mxu0 %v255
  %v436 = vpop.f32.mrf.mxu0
  %v437 = vadd.f32 0.0, %v436
  %v438 = vpop.f32.mrf.mxu0
  %v439 = vadd.f32 0.0, %v438
  %440 = vmatmul.bf16.gmra.mxu0 %v257
  %v441 = vpop.f32.mrf.mxu0
  %v442 = vadd.f32 0.0, %v441
  %v443 = vpop.f32.mrf.mxu0
  %v444 = vadd.f32 0.0, %v443
  %445 = vmatmul.bf16.gmra.mxu0 %v259
  %v446 = vpop.f32.mrf.mxu0
  %v447 = vadd.f32 0.0, %v446
  %v448 = vpop.f32.mrf.mxu0
  %v449 = vadd.f32 0.0, %v448
  %450 = vmatmul.bf16.gmra.mxu0 %v261
  %v451 = vpop.f32.mrf.mxu0
  %v452 = vadd.f32 0.0, %v451
  %v453 = vpop.f32.mrf.mxu0
  %v454 = vadd.f32 0.0, %v453
  %455 = vmatmul.bf16.gmra.mxu0 %v263
  %v456 = vpop.f32.mrf.mxu0
  %v457 = vadd.f32 0.0, %v456
  %v458 = vpop.f32.mrf.mxu0
  %v459 = vadd.f32 0.0, %v458
  %460 = vmatmul.bf16.gmra.mxu0 %v265
  %v461 = vpop.f32.mrf.mxu0
  %v462 = vadd.f32 0.0, %v461
  %v463 = vpop.f32.mrf.mxu0
  %v464 = vadd.f32 0.0, %v463
  %465 = vmatmul.bf16.gmra.mxu0 %v267
  %v466 = vpop.f32.mrf.mxu0
  %v467 = vadd.f32 0.0, %v466
  %v468 = vpop.f32.mrf.mxu0
  %v469 = vadd.f32 0.0, %v468
  %470 = vmatmul.bf16.gmra.mxu0 %v269
  %v471 = vpop.f32.mrf.mxu0
  %v472 = vadd.f32 0.0, %v471
  %v473 = vpop.f32.mrf.mxu0
  %v474 = vadd.f32 0.0, %v473
  %475 = vmatmul.bf16.gmra.mxu0 %v271
  %v476 = vpop.f32.mrf.mxu0
  %v477 = vadd.f32 0.0, %v476
  %v478 = vpop.f32.mrf.mxu0
  %v479 = vadd.f32 0.0, %v478
  %480 = vmatmul.bf16.gmra.mxu0 %v273
  %v481 = vpop.f32.mrf.mxu0
  %v482 = vadd.f32 0.0, %v481
  %v483 = vpop.f32.mrf.mxu0
  %v484 = vadd.f32 0.0, %v483
  %485 = vmatmul.bf16.gmra.mxu0 %v275
  %v486 = vpop.f32.mrf.mxu0
  %v487 = vadd.f32 0.0, %v486
  %v488 = vpop.f32.mrf.mxu0
  %v489 = vadd.f32 0.0, %v488
  %490 = vmatmul.bf16.gmra.mxu0 %v277
  %v491 = vpop.f32.mrf.mxu0
  %v492 = vadd.f32 0.0, %v491
  %v493 = vpop.f32.mrf.mxu0
  %v494 = vadd.f32 0.0, %v493
  %495 = vdwg.mxu0
  %496 = vmatpush.bf16.msra.mxu0 %v390
  %497 = vmatpush.bf16.msra.mxu0 %v389
  %498 = vmatpush.bf16.msra.mxu0 %v388
  %499 = vmatpush.bf16.msra.mxu0 %v387
  %500 = vmatpush.bf16.msra.mxu0 %v386
  %501 = vmatpush.bf16.msra.mxu0 %v385
  %502 = vmatpush.bf16.msra.mxu0 %v384
  %503 = vmatpush.bf16.msra.mxu0 %v383
  %504 = vmatmul.bf16.gmra.mxu0 %v248
  %v505 = vpop.f32.mrf.mxu0
  %v506 = vadd.f32 %v417, %v505
  %v507 = vpop.f32.mrf.mxu0
  %v508 = vadd.f32 %v419, %v507
  %509 = vmatmul.bf16.gmra.mxu0 %v250
  %v510 = vpop.f32.mrf.mxu0
  %v511 = vadd.f32 %v422, %v510
  %v512 = vpop.f32.mrf.mxu0
  %v513 = vadd.f32 %v424, %v512
  %514 = vmatmul.bf16.gmra.mxu0 %v252
  %v515 = vpop.f32.mrf.mxu0
  %v516 = vadd.f32 %v427, %v515
  %v517 = vpop.f32.mrf.mxu0
  %v518 = vadd.f32 %v429, %v517
  %519 = vmatmul.bf16.gmra.mxu0 %v254
  %v520 = vpop.f32.mrf.mxu0
  %v521 = vadd.f32 %v432, %v520
  %v522 = vpop.f32.mrf.mxu0
  %v523 = vadd.f32 %v434, %v522
  %524 = vmatmul.bf16.gmra.mxu0 %v256
  %v525 = vpop.f32.mrf.mxu0
  %v526 = vadd.f32 %v437, %v525
  %v527 = vpop.f32.mrf.mxu0
  %v528 = vadd.f32 %v439, %v527
  %529 = vmatmul.bf16.gmra.mxu0 %v258
  %v530 = vpop.f32.mrf.mxu0
  %v531 = vadd.f32 %v442, %v530
  %v532 = vpop.f32.mrf.mxu0
  %v533 = vadd.f32 %v444, %v532
  %534 = vmatmul.bf16.gmra.mxu0 %v260
  %v535 = vpop.f32.mrf.mxu0
  %v536 = vadd.f32 %v447, %v535
  %v537 = vpop.f32.mrf.mxu0
  %v538 = vadd.f32 %v449, %v537
  %539 = vmatmul.bf16.gmra.mxu0 %v262
  %v540 = vpop.f32.mrf.mxu0
  %v541 = vadd.f32 %v452, %v540
  %v542 = vpop.f32.mrf.mxu0
  %v543 = vadd.f32 %v454, %v542
  %544 = vmatmul.bf16.gmra.mxu0 %v264
  %v545 = vpop.f32.mrf.mxu0
  %v546 = vadd.f32 %v457, %v545
  %v547 = vpop.f32.mrf.mxu0
  %v548 = vadd.f32 %v459, %v547
  %549 = vmatmul.bf16.gmra.mxu0 %v266
  %v550 = vpop.f32.mrf.mxu0
  %v551 = vadd.f32 %v462, %v550
  %v552 = vpop.f32.mrf.mxu0
  %v553 = vadd.f32 %v464, %v552
  %554 = vmatmul.bf16.gmra.mxu0 %v268
  %v555 = vpop.f32.mrf.mxu0
  %v556 = vadd.f32 %v467, %v555
  %v557 = vpop.f32.mrf.mxu0
  %v558 = vadd.f32 %v469, %v557
  %559 = vmatmul.bf16.gmra.mxu0 %v270
  %v560 = vpop.f32.mrf.mxu0
  %v561 = vadd.f32 %v472, %v560
  %v562 = vpop.f32.mrf.mxu0
  %v563 = vadd.f32 %v474, %v562
  %564 = vmatmul.bf16.gmra.mxu0 %v272
  %v565 = vpop.f32.mrf.mxu0
  %v566 = vadd.f32 %v477, %v565
  %v567 = vpop.f32.mrf.mxu0
  %v568 = vadd.f32 %v479, %v567
  %569 = vmatmul.bf16.gmra.mxu0 %v274
  %v570 = vpop.f32.mrf.mxu0
  %v571 = vadd.f32 %v482, %v570
  %v572 = vpop.f32.mrf.mxu0
  %v573 = vadd.f32 %v484, %v572
  %574 = vmatmul.bf16.gmra.mxu0 %v276
  %v575 = vpop.f32.mrf.mxu0
  %v576 = vadd.f32 %v487, %v575
  %v577 = vpop.f32.mrf.mxu0
  %v578 = vadd.f32 %v489, %v577
  %579 = vmatmul.bf16.gmra.mxu0 %v278
  %v580 = vpop.f32.mrf.mxu0
  %v581 = vadd.f32 %v492, %v580
  %v582 = vpop.f32.mrf.mxu0
  %v583 = vadd.f32 %v494, %v582
  %584 = vdwg.mxu0
  %v585 = vadd.f32 %v87, %v506
  %v586 = vadd.f32 %v88, %v508
  %v587 = vadd.f32 %v89, %v511
  %v588 = vadd.f32 %v90, %v513
  %v589 = vadd.f32 %v91, %v516
  %v590 = vadd.f32 %v92, %v518
  %v591 = vadd.f32 %v93, %v521
  %v592 = vadd.f32 %v94, %v523
  %v593 = vadd.f32 %v95, %v526
  %v594 = vadd.f32 %v96, %v528
  %v595 = vadd.f32 %v97, %v531
  %v596 = vadd.f32 %v98, %v533
  %v597 = vadd.f32 %v99, %v536
  %v598 = vadd.f32 %v100, %v538
  %v599 = vadd.f32 %v101, %v541
  %v600 = vadd.f32 %v102, %v543
  %v601 = vadd.f32 %v103, %v546
  %v602 = vadd.f32 %v104, %v548
  %v603 = vadd.f32 %v105, %v551
  %v604 = vadd.f32 %v106, %v553
  %v605 = vadd.f32 %v107, %v556
  %v606 = vadd.f32 %v108, %v558
  %v607 = vadd.f32 %v109, %v561
  %v608 = vadd.f32 %v110, %v563
  %v609 = vadd.f32 %v111, %v566
  %v610 = vadd.f32 %v112, %v568
  %v611 = vadd.f32 %v113, %v571
  %v612 = vadd.f32 %v114, %v573
  %v613 = vadd.f32 %v115, %v576
  %v614 = vadd.f32 %v116, %v578
  %v615 = vadd.f32 %v117, %v581
  %v616 = vadd.f32 %v118, %v583
  %617 = vst [vmem:[#allocation2] sm:$0xff] %v585
  %618 = vst [vmem:[#allocation2 + $0x8] sm:$0xff] %v586
  %619 = vst [vmem:[#allocation2 + $0x10] sm:$0xff] %v587
  %620 = vst [vmem:[#allocation2 + $0x18] sm:$0xff] %v588
  %621 = vst [vmem:[#allocation2 + $0x20] sm:$0xff] %v589
  %622 = vst [vmem:[#allocation2 + $0x28] sm:$0xff] %v590
  %623 = vst [vmem:[#allocation2 + $0x30] sm:$0xff] %v591
  %624 = vst [vmem:[#allocation2 + $0x38] sm:$0xff] %v592
  %625 = vst [vmem:[#allocation2 + $0x40] sm:$0xff] %v593
  %626 = vst [vmem:[#allocation2 + $0x48] sm:$0xff] %v594
  %627 = vst [vmem:[#allocation2 + $0x50] sm:$0xff] %v595
  %628 = vst [vmem:[#allocation2 + $0x58] sm:$0xff] %v596
  %629 = vst [vmem:[#allocation2 + $0x60] sm:$0xff] %v597
  %630 = vst [vmem:[#allocation2 + $0x68] sm:$0xff] %v598
  %631 = vst [vmem:[#allocation2 + $0x70] sm:$0xff] %v599
  %632 = vst [vmem:[#allocation2 + $0x78] sm:$0xff] %v600
  %633 = vst [vmem:[#allocation2 + $0x80] sm:$0xff] %v601
  %634 = vst [vmem:[#allocation2 + $0x88] sm:$0xff] %v602
  %635 = vst [vmem:[#allocation2 + $0x90] sm:$0xff] %v603
  %636 = vst [vmem:[#allocation2 + $0x98] sm:$0xff] %v604
  %637 = vst [vmem:[#allocation2 + $0xa0] sm:$0xff] %v605
  %638 = vst [vmem:[#allocation2 + $0xa8] sm:$0xff] %v606
  %639 = vst [vmem:[#allocation2 + $0xb0] sm:$0xff] %v607
  %640 = vst [vmem:[#allocation2 + $0xb8] sm:$0xff] %v608
  %641 = vst [vmem:[#allocation2 + $0xc0] sm:$0xff] %v609
  %642 = vst [vmem:[#allocation2 + $0xc8] sm:$0xff] %v610
  %643 = vst [vmem:[#allocation2 + $0xd0] sm:$0xff] %v611
  %644 = vst [vmem:[#allocation2 + $0xd8] sm:$0xff] %v612
  %645 = vst [vmem:[#allocation2 + $0xe0] sm:$0xff] %v613
  %646 = vst [vmem:[#allocation2 + $0xe8] sm:$0xff] %v614
  %647 = vst [vmem:[#allocation2 + $0xf0] sm:$0xff] %v615
  %648 = vst [vmem:[#allocation2 + $0xf8] sm:$0xff] %v616
  // Predicated region
  $region18: #{gnn_forward.6} parent=0 // pred_check
    %p649 = pneg %p14
  $region19: #{gnn_forward.6} parent=0 // pred_check_branch
    %651 = sbr.rel (%p649) target = $region21
  $region20: #{gnn_forward.6} parent=0 // pred_region
    %v652 = vld [vmem:[#allocation2] sm:$0xff]
    %v653 = vld [vmem:[#allocation2 + $0x8] sm:$0xff]
    %v654 = vld [vmem:[#allocation2 + $0x10] sm:$0xff]
    %v655 = vld [vmem:[#allocation2 + $0x18] sm:$0xff]
    %v656 = vld [vmem:[#allocation2 + $0x20] sm:$0xff]
    %v657 = vld [vmem:[#allocation2 + $0x28] sm:$0xff]
    %v658 = vld [vmem:[#allocation2 + $0x30] sm:$0xff]
    %v659 = vld [vmem:[#allocation2 + $0x38] sm:$0xff]
    %v660 = vld [vmem:[#allocation2 + $0x40] sm:$0xff]
    %v661 = vld [vmem:[#allocation2 + $0x48] sm:$0xff]
    %v662 = vld [vmem:[#allocation2 + $0x50] sm:$0xff]
    %v663 = vld [vmem:[#allocation2 + $0x58] sm:$0xff]
    %v664 = vld [vmem:[#allocation2 + $0x60] sm:$0xff]
    %v665 = vld [vmem:[#allocation2 + $0x68] sm:$0xff]
    %v666 = vld [vmem:[#allocation2 + $0x70] sm:$0xff]
    %v667 = vld [vmem:[#allocation2 + $0x78] sm:$0xff]
    %v668 = vld [vmem:[#allocation2 + $0x80] sm:$0xff]
    %v669 = vld [vmem:[#allocation2 + $0x88] sm:$0xff]
    %v670 = vld [vmem:[#allocation2 + $0x90] sm:$0xff]
    %v671 = vld [vmem:[#allocation2 + $0x98] sm:$0xff]
    %v672 = vld [vmem:[#allocation2 + $0xa0] sm:$0xff]
    %v673 = vld [vmem:[#allocation2 + $0xa8] sm:$0xff]
    %v674 = vld [vmem:[#allocation2 + $0xb0] sm:$0xff]
    %v675 = vld [vmem:[#allocation2 + $0xb8] sm:$0xff]
    %v676 = vld [vmem:[#allocation2 + $0xc0] sm:$0xff]
    %v677 = vld [vmem:[#allocation2 + $0xc8] sm:$0xff]
    %v678 = vld [vmem:[#allocation2 + $0xd0] sm:$0xff]
    %v679 = vld [vmem:[#allocation2 + $0xd8] sm:$0xff]
    %v680 = vld [vmem:[#allocation2 + $0xe0] sm:$0xff]
    %v681 = vld [vmem:[#allocation2 + $0xe8] sm:$0xff]
    %v682 = vld [vmem:[#allocation2 + $0xf0] sm:$0xff]
    %v683 = vld [vmem:[#allocation2 + $0xf8] sm:$0xff]
    %v684 = vld [vmem:[%s2] sm:$0x1]
    %v686 = vperm.slane %v684, 0
    %v688 = vadd.f32 %v652, %v686
    %v689 = vadd.f32 %v653, %v686
    %v690 = vadd.f32 %v654, %v686
    %v691 = vadd.f32 %v655, %v686
    %v692 = vadd.f32 %v656, %v686
    %v693 = vadd.f32 %v657, %v686
    %v694 = vadd.f32 %v658, %v686
    %v695 = vadd.f32 %v659, %v686
    %v696 = vadd.f32 %v660, %v686
    %v697 = vadd.f32 %v661, %v686
    %v698 = vadd.f32 %v662, %v686
    %v699 = vadd.f32 %v663, %v686
    %v700 = vadd.f32 %v664, %v686
    %v701 = vadd.f32 %v665, %v686
    %v702 = vadd.f32 %v666, %v686
    %v703 = vadd.f32 %v667, %v686
    %v704 = vadd.f32 %v668, %v686
    %v705 = vadd.f32 %v669, %v686
    %v706 = vadd.f32 %v670, %v686
    %v707 = vadd.f32 %v671, %v686
    %v708 = vadd.f32 %v672, %v686
    %v709 = vadd.f32 %v673, %v686
    %v710 = vadd.f32 %v674, %v686
    %v711 = vadd.f32 %v675, %v686
    %v712 = vadd.f32 %v676, %v686
    %v713 = vadd.f32 %v677, %v686
    %v714 = vadd.f32 %v678, %v686
    %v715 = vadd.f32 %v679, %v686
    %v716 = vadd.f32 %v680, %v686
    %v717 = vadd.f32 %v681, %v686
    %v718 = vadd.f32 %v682, %v686
    %v719 = vadd.f32 %v683, %v686
    %v720 = vmax.f32 %v688, 0.0
    %v721 = vmax.f32 %v689, 0.0
    %v722 = vmax.f32 %v690, 0.0
    %v723 = vmax.f32 %v691, 0.0
    %v724 = vmax.f32 %v692, 0.0
    %v725 = vmax.f32 %v693, 0.0
    %v726 = vmax.f32 %v694, 0.0
    %v727 = vmax.f32 %v695, 0.0
    %v728 = vmax.f32 %v696, 0.0
    %v729 = vmax.f32 %v697, 0.0
    %v730 = vmax.f32 %v698, 0.0
    %v731 = vmax.f32 %v699, 0.0
    %v732 = vmax.f32 %v700, 0.0
    %v733 = vmax.f32 %v701, 0.0
    %v734 = vmax.f32 %v702, 0.0
    %v735 = vmax.f32 %v703, 0.0
    %v736 = vmax.f32 %v704, 0.0
    %v737 = vmax.f32 %v705, 0.0
    %v738 = vmax.f32 %v706, 0.0
    %v739 = vmax.f32 %v707, 0.0
    %v740 = vmax.f32 %v708, 0.0
    %v741 = vmax.f32 %v709, 0.0
    %v742 = vmax.f32 %v710, 0.0
    %v743 = vmax.f32 %v711, 0.0
    %v744 = vmax.f32 %v712, 0.0
    %v745 = vmax.f32 %v713, 0.0
    %v746 = vmax.f32 %v714, 0.0
    %v747 = vmax.f32 %v715, 0.0
    %v748 = vmax.f32 %v716, 0.0
    %v749 = vmax.f32 %v717, 0.0
    %v750 = vmax.f32 %v718, 0.0
    %v751 = vmax.f32 %v719, 0.0
    %v752 = vpack.c.bf16 %v720, %v720
    %v753 = vpack.c.bf16 %v721, %v721
    %v754 = vpack.c.bf16 %v722, %v722
    %v755 = vpack.c.bf16 %v723, %v723
    %v756 = vpack.c.bf16 %v724, %v724
    %v757 = vpack.c.bf16 %v725, %v725
    %v758 = vpack.c.bf16 %v726, %v726
    %v759 = vpack.c.bf16 %v727, %v727
    %v760 = vpack.c.bf16 %v728, %v728
    %v761 = vpack.c.bf16 %v729, %v729
    %v762 = vpack.c.bf16 %v730, %v730
    %v763 = vpack.c.bf16 %v731, %v731
    %v764 = vpack.c.bf16 %v732, %v732
    %v765 = vpack.c.bf16 %v733, %v733
    %v766 = vpack.c.bf16 %v734, %v734
    %v767 = vpack.c.bf16 %v735, %v735
    %v768 = vpack.c.bf16 %v736, %v736
    %v769 = vpack.c.bf16 %v737, %v737
    %v770 = vpack.c.bf16 %v738, %v738
    %v771 = vpack.c.bf16 %v739, %v739
    %v772 = vpack.c.bf16 %v740, %v740
    %v773 = vpack.c.bf16 %v741, %v741
    %v774 = vpack.c.bf16 %v742, %v742
    %v775 = vpack.c.bf16 %v743, %v743
    %v776 = vpack.c.bf16 %v744, %v744
    %v777 = vpack.c.bf16 %v745, %v745
    %v778 = vpack.c.bf16 %v746, %v746
    %v779 = vpack.c.bf16 %v747, %v747
    %v780 = vpack.c.bf16 %v748, %v748
    %v781 = vpack.c.bf16 %v749, %v749
    %v782 = vpack.c.bf16 %v750, %v750
    %v783 = vpack.c.bf16 %v751, %v751
    %784 = vst [vmem:[%s3] sm:$0xf] %v752
    %785 = vst [vmem:[%s3 + $0x4] sm:$0xf] %v753
    %786 = vst [vmem:[%s3 + $0x8] sm:$0xf] %v754
    %787 = vst [vmem:[%s3 + $0xc] sm:$0xf] %v755
    %788 = vst [vmem:[%s3 + $0x10] sm:$0xf] %v756
    %789 = vst [vmem:[%s3 + $0x14] sm:$0xf] %v757
    %790 = vst [vmem:[%s3 + $0x18] sm:$0xf] %v758
    %791 = vst [vmem:[%s3 + $0x1c] sm:$0xf] %v759
    %792 = vst [vmem:[%s3 + $0x20] sm:$0xf] %v760
    %793 = vst [vmem:[%s3 + $0x24] sm:$0xf] %v761
    %794 = vst [vmem:[%s3 + $0x28] sm:$0xf] %v762
    %795 = vst [vmem:[%s3 + $0x2c] sm:$0xf] %v763
    %796 = vst [vmem:[%s3 + $0x30] sm:$0xf] %v764
    %797 = vst [vmem:[%s3 + $0x34] sm:$0xf] %v765
    %798 = vst [vmem:[%s3 + $0x38] sm:$0xf] %v766
    %799 = vst [vmem:[%s3 + $0x3c] sm:$0xf] %v767
    %800 = vst [vmem:[%s3 + $0x40] sm:$0xf] %v768
    %801 = vst [vmem:[%s3 + $0x44] sm:$0xf] %v769
    %802 = vst [vmem:[%s3 + $0x48] sm:$0xf] %v770
    %803 = vst [vmem:[%s3 + $0x4c] sm:$0xf] %v771
    %804 = vst [vmem:[%s3 + $0x50] sm:$0xf] %v772
    %805 = vst [vmem:[%s3 + $0x54] sm:$0xf] %v773
    %806 = vst [vmem:[%s3 + $0x58] sm:$0xf] %v774
    %807 = vst [vmem:[%s3 + $0x5c] sm:$0xf] %v775
    %808 = vst [vmem:[%s3 + $0x60] sm:$0xf] %v776
    %809 = vst [vmem:[%s3 + $0x64] sm:$0xf] %v777
    %810 = vst [vmem:[%s3 + $0x68] sm:$0xf] %v778
    %811 = vst [vmem:[%s3 + $0x6c] sm:$0xf] %v779
    %812 = vst [vmem:[%s3 + $0x70] sm:$0xf] %v780
    %813 = vst [vmem:[%s3 + $0x74] sm:$0xf] %v781
    %814 = vst [vmem:[%s3 + $0x78] sm:$0xf] %v782
    %815 = vst [vmem:[%s3 + $0x7c] sm:$0xf] %v783
  $region21: #{gnn_forward.6} parent=0 // pred_fallthru
    _
  // Predicated region
  $region22: #{gnn_forward.6} parent=0 // pred_check
    _
  $region23: #{gnn_forward.6} parent=0 // pred_check_branch
    %817 = sbr.rel (0) target = $region25
  $region24: #{gnn_forward.6} parent=0 // pred_region
    _
  $region25: #{gnn_forward.6} parent=0 // pred_fallthru
    _
  // Predicated region
  $region26: #{gnn_forward.6} parent=0 // pred_check
    _
  $region27: #{gnn_forward.6} parent=0 // pred_check_branch
    %819 = sbr.rel (0) target = $region29
  $region28: #{gnn_forward.6} parent=0 // pred_region
    _
  $region29: #{gnn_forward.6} parent=0 // pred_fallthru
    _

// kernel: gnn_forward.5
$region0: #{gnn_forward.5}
  #allocation0 [shape = 'u32[]', space=smem, size = 0x4, offset = 0x4, fixed_abs, tag = 'smem constant byte address 0x4 - core index']
  #allocation1 [shape = 'u32[72,128]{1,0:T(1,128)}', space=vmem, size = 0x9000, scoped, tag = 'internal scratch']
  #allocation2 [shape = 'f32[256,128]{1,0:T(8,128)}', space=vmem, size = 0x20000, scoped, tag = 'scratch operand']
  %s0 = inlined_call_operand.vmem [shape: bf16[256,256], index: 0, kind: input, shape index: {}]
  %s1 = inlined_call_operand.vmem [shape: bf16[256,128], index: 1, kind: input, shape index: {}]
  %s2 = inlined_call_operand.vmem [shape: f32[1,128], index: 2, kind: input, shape index: {}]
  %s3 = inlined_call_operand.vmem [shape: bf16[128,128], index: 3, kind: input, shape index: {}]
  %s4 = inlined_call_operand.vmem [shape: bf16[256,128], index: 4, kind: output, shape index: {}]
  %s5 = sld [smem:[#allocation0]]
  $region34: #{gnn_forward.5} parent=0
    _
  %s7 = ssub.s32 1, %s5
  %s8 = scalar_select 0, %s7, %s5
  // Predicated region
  $region2: #{gnn_forward.5} parent=0 // pred_check
    _
  $region3: #{gnn_forward.5} parent=0 // pred_check_branch
    %10 = sbr.rel (0) target = $region5
  $region4: #{gnn_forward.5} parent=0 // pred_region
    _
  $region5: #{gnn_forward.5} parent=0 // pred_fallthru
    _
  // Predicated region
  $region6: #{gnn_forward.5} parent=0 // pred_check
    _
  $region7: #{gnn_forward.5} parent=0 // pred_check_branch
    %12 = sbr.rel (0) target = $region9
  $region8: #{gnn_forward.5} parent=0 // pred_region
    _
  $region9: #{gnn_forward.5} parent=0 // pred_fallthru
    _
  // Predicated region
  $region10: #{gnn_forward.5} parent=0 // pred_check
    _
  $region11: #{gnn_forward.5} parent=0 // pred_check_branch
    %14 = sbr.rel (0) target = $region13
  $region12: #{gnn_forward.5} parent=0 // pred_region
    _
  $region13: #{gnn_forward.5} parent=0 // pred_fallthru
    _
  // Predicated region
  $region14: #{gnn_forward.5} parent=0 // pred_check
    _
  $region15: #{gnn_forward.5} parent=0 // pred_check_branch
    %16 = sbr.rel (0) target = $region17
  $region16: #{gnn_forward.5} parent=0 // pred_region
    _
  $region17: #{gnn_forward.5} parent=0 // pred_fallthru
    _
  %p17 = scmp.eq.s32.totalorder 0, 0
  // Predicated region
  $region18: #{gnn_forward.5} parent=0 // pred_check
    %p18 = pneg %p17
  $region19: #{gnn_forward.5} parent=0 // pred_check_branch
    %20 = sbr.rel (%p18) target = $region21
  $region20: #{gnn_forward.5} parent=0 // pred_region
    %21 = vst [vmem:[#allocation2] sm:$0xff] 0.0
    %22 = vst [vmem:[#allocation2 + $0x8] sm:$0xff] 0.0
    %23 = vst [vmem:[#allocation2 + $0x10] sm:$0xff] 0.0
    %24 = vst [vmem:[#allocation2 + $0x18] sm:$0xff] 0.0
    %25 = vst [vmem:[#allocation2 + $0x20] sm:$0xff] 0.0
    %26 = vst [vmem:[#allocation2 + $0x28] sm:$0xff] 0.0
    %27 = vst [vmem:[#allocation2 + $0x30] sm:$0xff] 0.0
    %28 = vst [vmem:[#allocation2 + $0x38] sm:$0xff] 0.0
    %29 = vst [vmem:[#allocation2 + $0x40] sm:$0xff] 0.0
    %30 = vst [vmem:[#allocation2 + $0x48] sm:$0xff] 0.0
    %31 = vst [vmem:[#allocation2 + $0x50] sm:$0xff] 0.0
    %32 = vst [vmem:[#allocation2 + $0x58] sm:$0xff] 0.0
    %33 = vst [vmem:[#allocation2 + $0x60] sm:$0xff] 0.0
    %34 = vst [vmem:[#allocation2 + $0x68] sm:$0xff] 0.0
    %35 = vst [vmem:[#allocation2 + $0x70] sm:$0xff] 0.0
    %36 = vst [vmem:[#allocation2 + $0x78] sm:$0xff] 0.0
    %37 = vst [vmem:[#allocation2 + $0x80] sm:$0xff] 0.0
    %38 = vst [vmem:[#allocation2 + $0x88] sm:$0xff] 0.0
    %39 = vst [vmem:[#allocation2 + $0x90] sm:$0xff] 0.0
    %40 = vst [vmem:[#allocation2 + $0x98] sm:$0xff] 0.0
    %41 = vst [vmem:[#allocation2 + $0xa0] sm:$0xff] 0.0
    %42 = vst [vmem:[#allocation2 + $0xa8] sm:$0xff] 0.0
    %43 = vst [vmem:[#allocation2 + $0xb0] sm:$0xff] 0.0
    %44 = vst [vmem:[#allocation2 + $0xb8] sm:$0xff] 0.0
    %45 = vst [vmem:[#allocation2 + $0xc0] sm:$0xff] 0.0
    %46 = vst [vmem:[#allocation2 + $0xc8] sm:$0xff] 0.0
    %47 = vst [vmem:[#allocation2 + $0xd0] sm:$0xff] 0.0
    %48 = vst [vmem:[#allocation2 + $0xd8] sm:$0xff] 0.0
    %49 = vst [vmem:[#allocation2 + $0xe0] sm:$0xff] 0.0
    %50 = vst [vmem:[#allocation2 + $0xe8] sm:$0xff] 0.0
    %51 = vst [vmem:[#allocation2 + $0xf0] sm:$0xff] 0.0
    %52 = vst [vmem:[#allocation2 + $0xf8] sm:$0xff] 0.0
  $region21: #{gnn_forward.5} parent=0 // pred_fallthru
    _
  %s53 = smul.u32 0, 256
  %s54 = sshra.s32 %s53, 3
  %s55 = sand.u32 %s53, 7
  %s56 = smul.addr %s54, 4
  %s57 = scalar_lea.vmem %s1, %s56
  %v58 = vld [vmem:[%s57] sm:$0xf]
  %v59 = vld [vmem:[%s57 + $0x4] sm:$0xf]
  %v60 = vld [vmem:[%s57 + $0x8] sm:$0xf]
  %v61 = vld [vmem:[%s57 + $0xc] sm:$0xf]
  %v62 = vld [vmem:[%s57 + $0x10] sm:$0xf]
  %v63 = vld [vmem:[%s57 + $0x14] sm:$0xf]
  %v64 = vld [vmem:[%s57 + $0x18] sm:$0xf]
  %v65 = vld [vmem:[%s57 + $0x1c] sm:$0xf]
  %v66 = vld [vmem:[%s57 + $0x20] sm:$0xf]
  %v67 = vld [vmem:[%s57 + $0x24] sm:$0xf]
  %v68 = vld [vmem:[%s57 + $0x28] sm:$0xf]
  %v69 = vld [vmem:[%s57 + $0x2c] sm:$0xf]
  %v70 = vld [vmem:[%s57 + $0x30] sm:$0xf]
  %v71 = vld [vmem:[%s57 + $0x34] sm:$0xf]
  %v72 = vld [vmem:[%s57 + $0x38] sm:$0xf]
  %v73 = vld [vmem:[%s57 + $0x3c] sm:$0xf]
  %v74 = vld [vmem:[%s57 + $0x40] sm:$0xf]
  %v75 = vld [vmem:[%s57 + $0x44] sm:$0xf]
  %v76 = vld [vmem:[%s57 + $0x48] sm:$0xf]
  %v77 = vld [vmem:[%s57 + $0x4c] sm:$0xf]
  %v78 = vld [vmem:[%s57 + $0x50] sm:$0xf]
  %v79 = vld [vmem:[%s57 + $0x54] sm:$0xf]
  %v80 = vld [vmem:[%s57 + $0x58] sm:$0xf]
  %v81 = vld [vmem:[%s57 + $0x5c] sm:$0xf]
  %v82 = vld [vmem:[%s57 + $0x60] sm:$0xf]
  %v83 = vld [vmem:[%s57 + $0x64] sm:$0xf]
  %v84 = vld [vmem:[%s57 + $0x68] sm:$0xf]
  %v85 = vld [vmem:[%s57 + $0x6c] sm:$0xf]
  %v86 = vld [vmem:[%s57 + $0x70] sm:$0xf]
  %v87 = vld [vmem:[%s57 + $0x74] sm:$0xf]
  %v88 = vld [vmem:[%s57 + $0x78] sm:$0xf]
  %v89 = vld [vmem:[%s57 + $0x7c] sm:$0xf]
  %v90 = vld [vmem:[#allocation2] sm:$0xff]
  %v91 = vld [vmem:[#allocation2 + $0x8] sm:$0xff]
  %v92 = vld [vmem:[#allocation2 + $0x10] sm:$0xff]
  %v93 = vld [vmem:[#allocation2 + $0x18] sm:$0xff]
  %v94 = vld [vmem:[#allocation2 + $0x20] sm:$0xff]
  %v95 = vld [vmem:[#allocation2 + $0x28] sm:$0xff]
  %v96 = vld [vmem:[#allocation2 + $0x30] sm:$0xff]
  %v97 = vld [vmem:[#allocation2 + $0x38] sm:$0xff]
  %v98 = vld [vmem:[#allocation2 + $0x40] sm:$0xff]
  %v99 = vld [vmem:[#allocation2 + $0x48] sm:$0xff]
  %v100 = vld [vmem:[#allocation2 + $0x50] sm:$0xff]
  %v101 = vld [vmem:[#allocation2 + $0x58] sm:$0xff]
  %v102 = vld [vmem:[#allocation2 + $0x60] sm:$0xff]
  %v103 = vld [vmem:[#allocation2 + $0x68] sm:$0xff]
  %v104 = vld [vmem:[#allocation2 + $0x70] sm:$0xff]
  %v105 = vld [vmem:[#allocation2 + $0x78] sm:$0xff]
  %v106 = vld [vmem:[#allocation2 + $0x80] sm:$0xff]
  %v107 = vld [vmem:[#allocation2 + $0x88] sm:$0xff]
  %v108 = vld [vmem:[#allocation2 + $0x90] sm:$0xff]
  %v109 = vld [vmem:[#allocation2 + $0x98] sm:$0xff]
  %v110 = vld [vmem:[#allocation2 + $0xa0] sm:$0xff]
  %v111 = vld [vmem:[#allocation2 + $0xa8] sm:$0xff]
  %v112 = vld [vmem:[#allocation2 + $0xb0] sm:$0xff]
  %v113 = vld [vmem:[#allocation2 + $0xb8] sm:$0xff]
  %v114 = vld [vmem:[#allocation2 + $0xc0] sm:$0xff]
  %v115 = vld [vmem:[#allocation2 + $0xc8] sm:$0xff]
  %v116 = vld [vmem:[#allocation2 + $0xd0] sm:$0xff]
  %v117 = vld [vmem:[#allocation2 + $0xd8] sm:$0xff]
  %v118 = vld [vmem:[#allocation2 + $0xe0] sm:$0xff]
  %v119 = vld [vmem:[#allocation2 + $0xe8] sm:$0xff]
  %v120 = vld [vmem:[#allocation2 + $0xf0] sm:$0xff]
  %v121 = vld [vmem:[#allocation2 + $0xf8] sm:$0xff]
  %v122 = vld [vmem:[%s0] sm:$0xff]
  %v123 = vld [vmem:[%s0 + $0x8] sm:$0xff]
  %v124 = vld [vmem:[%s0 + $0x10] sm:$0xff]
  %v125 = vld [vmem:[%s0 + $0x18] sm:$0xff]
  %v126 = vld [vmem:[%s0 + $0x20] sm:$0xff]
  %v127 = vld [vmem:[%s0 + $0x28] sm:$0xff]
  %v128 = vld [vmem:[%s0 + $0x30] sm:$0xff]
  %v129 = vld [vmem:[%s0 + $0x38] sm:$0xff]
  %v130 = vld [vmem:[%s0 + $0x40] sm:$0xff]
  %v131 = vld [vmem:[%s0 + $0x48] sm:$0xff]
  %v132 = vld [vmem:[%s0 + $0x50] sm:$0xff]
  %v133 = vld [vmem:[%s0 + $0x58] sm:$0xff]
  %v134 = vld [vmem:[%s0 + $0x60] sm:$0xff]
  %v135 = vld [vmem:[%s0 + $0x68] sm:$0xff]
  %v136 = vld [vmem:[%s0 + $0x70] sm:$0xff]
  %v137 = vld [vmem:[%s0 + $0x78] sm:$0xff]
  %v138 = vld [vmem:[%s0 + $0x80] sm:$0xff]
  %v139 = vld [vmem:[%s0 + $0x88] sm:$0xff]
  %v140 = vld [vmem:[%s0 + $0x90] sm:$0xff]
  %v141 = vld [vmem:[%s0 + $0x98] sm:$0xff]
  %v142 = vld [vmem:[%s0 + $0xa0] sm:$0xff]
  %v143 = vld [vmem:[%s0 + $0xa8] sm:$0xff]
  %v144 = vld [vmem:[%s0 + $0xb0] sm:$0xff]
  %v145 = vld [vmem:[%s0 + $0xb8] sm:$0xff]
  %v146 = vld [vmem:[%s0 + $0xc0] sm:$0xff]
  %v147 = vld [vmem:[%s0 + $0xc8] sm:$0xff]
  %v148 = vld [vmem:[%s0 + $0xd0] sm:$0xff]
  %v149 = vld [vmem:[%s0 + $0xd8] sm:$0xff]
  %v150 = vld [vmem:[%s0 + $0xe0] sm:$0xff]
  %v151 = vld [vmem:[%s0 + $0xe8] sm:$0xff]
  %v152 = vld [vmem:[%s0 + $0xf0] sm:$0xff]
  %v153 = vld [vmem:[%s0 + $0xf8] sm:$0xff]
  %v186 = vunpack.c.l.b16 %v122
  %v187 = vunpack.c.h.b16 %v122
  %v188 = vunpack.c.l.b16 %v123
  %v189 = vunpack.c.h.b16 %v123
  %v190 = vunpack.c.l.b16 %v124
  %v191 = vunpack.c.h.b16 %v124
  %v192 = vunpack.c.l.b16 %v125
  %v193 = vunpack.c.h.b16 %v125
  %v194 = vunpack.c.l.b16 %v126
  %v195 = vunpack.c.h.b16 %v126
  %v196 = vunpack.c.l.b16 %v127
  %v197 = vunpack.c.h.b16 %v127
  %v198 = vunpack.c.l.b16 %v128
  %v199 = vunpack.c.h.b16 %v128
  %v200 = vunpack.c.l.b16 %v129
  %v201 = vunpack.c.h.b16 %v129
  %v202 = vunpack.c.l.b16 %v130
  %v203 = vunpack.c.h.b16 %v130
  %v204 = vunpack.c.l.b16 %v131
  %v205 = vunpack.c.h.b16 %v131
  %v206 = vunpack.c.l.b16 %v132
  %v207 = vunpack.c.h.b16 %v132
  %v208 = vunpack.c.l.b16 %v133
  %v209 = vunpack.c.h.b16 %v133
  %v210 = vunpack.c.l.b16 %v134
  %v211 = vunpack.c.h.b16 %v134
  %v212 = vunpack.c.l.b16 %v135
  %v213 = vunpack.c.h.b16 %v135
  %v214 = vunpack.c.l.b16 %v136
  %v215 = vunpack.c.h.b16 %v136
  %v216 = vunpack.c.l.b16 %v137
  %v217 = vunpack.c.h.b16 %v137
  %v218 = vunpack.c.l.b16 %v138
  %v219 = vunpack.c.h.b16 %v138
  %v220 = vunpack.c.l.b16 %v139
  %v221 = vunpack.c.h.b16 %v139
  %v222 = vunpack.c.l.b16 %v140
  %v223 = vunpack.c.h.b16 %v140
  %v224 = vunpack.c.l.b16 %v141
  %v225 = vunpack.c.h.b16 %v141
  %v226 = vunpack.c.l.b16 %v142
  %v227 = vunpack.c.h.b16 %v142
  %v228 = vunpack.c.l.b16 %v143
  %v229 = vunpack.c.h.b16 %v143
  %v230 = vunpack.c.l.b16 %v144
  %v231 = vunpack.c.h.b16 %v144
  %v232 = vunpack.c.l.b16 %v145
  %v233 = vunpack.c.h.b16 %v145
  %v234 = vunpack.c.l.b16 %v146
  %v235 = vunpack.c.h.b16 %v146
  %v236 = vunpack.c.l.b16 %v147
  %v237 = vunpack.c.h.b16 %v147
  %v238 = vunpack.c.l.b16 %v148
  %v239 = vunpack.c.h.b16 %v148
  %v240 = vunpack.c.l.b16 %v149
  %v241 = vunpack.c.h.b16 %v149
  %v242 = vunpack.c.l.b16 %v150
  %v243 = vunpack.c.h.b16 %v150
  %v244 = vunpack.c.l.b16 %v151
  %v245 = vunpack.c.h.b16 %v151
  %v246 = vunpack.c.l.b16 %v152
  %v247 = vunpack.c.h.b16 %v152
  %v248 = vunpack.c.l.b16 %v153
  %v249 = vunpack.c.h.b16 %v153
  %v250 = vpack.c.b16 %v188, %v186
  %v251 = vpack.c.b16 %v189, %v187
  %v252 = vpack.c.b16 %v192, %v190
  %v253 = vpack.c.b16 %v193, %v191
  %v254 = vpack.c.b16 %v196, %v194
  %v255 = vpack.c.b16 %v197, %v195
  %v256 = vpack.c.b16 %v200, %v198
  %v257 = vpack.c.b16 %v201, %v199
  %v258 = vpack.c.b16 %v204, %v202
  %v259 = vpack.c.b16 %v205, %v203
  %v260 = vpack.c.b16 %v208, %v206
  %v261 = vpack.c.b16 %v209, %v207
  %v262 = vpack.c.b16 %v212, %v210
  %v263 = vpack.c.b16 %v213, %v211
  %v264 = vpack.c.b16 %v216, %v214
  %v265 = vpack.c.b16 %v217, %v215
  %v266 = vpack.c.b16 %v220, %v218
  %v267 = vpack.c.b16 %v221, %v219
  %v268 = vpack.c.b16 %v224, %v222
  %v269 = vpack.c.b16 %v225, %v223
  %v270 = vpack.c.b16 %v228, %v226
  %v271 = vpack.c.b16 %v229, %v227
  %v272 = vpack.c.b16 %v232, %v230
  %v273 = vpack.c.b16 %v233, %v231
  %v274 = vpack.c.b16 %v236, %v234
  %v275 = vpack.c.b16 %v237, %v235
  %v276 = vpack.c.b16 %v240, %v238
  %v277 = vpack.c.b16 %v241, %v239
  %v278 = vpack.c.b16 %v244, %v242
  %v279 = vpack.c.b16 %v245, %v243
  %v280 = vpack.c.b16 %v248, %v246
  %v281 = vpack.c.b16 %v249, %v247
  %v346 = vunpack.c.l.b16 %v58
  %v347 = vunpack.c.l.b16 %v59
  %v348 = vunpack.c.l.b16 %v60
  %v349 = vunpack.c.l.b16 %v61
  %v350 = vunpack.c.l.b16 %v62
  %v351 = vunpack.c.l.b16 %v63
  %v352 = vunpack.c.l.b16 %v64
  %v353 = vunpack.c.l.b16 %v65
  %v354 = vunpack.c.l.b16 %v66
  %v355 = vunpack.c.l.b16 %v67
  %v356 = vunpack.c.l.b16 %v68
  %v357 = vunpack.c.l.b16 %v69
  %v358 = vunpack.c.l.b16 %v70
  %v359 = vunpack.c.l.b16 %v71
  %v360 = vunpack.c.l.b16 %v72
  %v361 = vunpack.c.l.b16 %v73
  %v362 = vunpack.c.l.b16 %v74
  %v363 = vunpack.c.l.b16 %v75
  %v364 = vunpack.c.l.b16 %v76
  %v365 = vunpack.c.l.b16 %v77
  %v366 = vunpack.c.l.b16 %v78
  %v367 = vunpack.c.l.b16 %v79
  %v368 = vunpack.c.l.b16 %v80
  %v369 = vunpack.c.l.b16 %v81
  %v370 = vunpack.c.l.b16 %v82
  %v371 = vunpack.c.l.b16 %v83
  %v372 = vunpack.c.l.b16 %v84
  %v373 = vunpack.c.l.b16 %v85
  %v374 = vunpack.c.l.b16 %v86
  %v375 = vunpack.c.l.b16 %v87
  %v376 = vunpack.c.l.b16 %v88
  %v377 = vunpack.c.l.b16 %v89
  %v378 = vpack.c.b16 %v347, %v346
  %v379 = vpack.c.b16 %v349, %v348
  %v380 = vpack.c.b16 %v351, %v350
  %v381 = vpack.c.b16 %v353, %v352
  %v382 = vpack.c.b16 %v355, %v354
  %v383 = vpack.c.b16 %v357, %v356
  %v384 = vpack.c.b16 %v359, %v358
  %v385 = vpack.c.b16 %v361, %v360
  %v386 = vpack.c.b16 %v363, %v362
  %v387 = vpack.c.b16 %v365, %v364
  %v388 = vpack.c.b16 %v367, %v366
  %v389 = vpack.c.b16 %v369, %v368
  %v390 = vpack.c.b16 %v371, %v370
  %v391 = vpack.c.b16 %v373, %v372
  %v392 = vpack.c.b16 %v375, %v374
  %v393 = vpack.c.b16 %v377, %v376
  %410 = vmatpush.bf16.msra.mxu0 %v385
  %411 = vmatpush.bf16.msra.mxu0 %v384
  %412 = vmatpush.bf16.msra.mxu0 %v383
  %413 = vmatpush.bf16.msra.mxu0 %v382
  %414 = vmatpush.bf16.msra.mxu0 %v381
  %415 = vmatpush.bf16.msra.mxu0 %v380
  %416 = vmatpush.bf16.msra.mxu0 %v379
  %417 = vmatpush.bf16.msra.mxu0 %v378
  %418 = vmatmul.bf16.gmra.mxu0 %v250
  %v419 = vpop.f32.mrf.mxu0
  %v420 = vadd.f32 0.0, %v419
  %v421 = vpop.f32.mrf.mxu0
  %v422 = vadd.f32 0.0, %v421
  %423 = vmatmul.bf16.gmra.mxu0 %v252
  %v424 = vpop.f32.mrf.mxu0
  %v425 = vadd.f32 0.0, %v424
  %v426 = vpop.f32.mrf.mxu0
  %v427 = vadd.f32 0.0, %v426
  %428 = vmatmul.bf16.gmra.mxu0 %v254
  %v429 = vpop.f32.mrf.mxu0
  %v430 = vadd.f32 0.0, %v429
  %v431 = vpop.f32.mrf.mxu0
  %v432 = vadd.f32 0.0, %v431
  %433 = vmatmul.bf16.gmra.mxu0 %v256
  %v434 = vpop.f32.mrf.mxu0
  %v435 = vadd.f32 0.0, %v434
  %v436 = vpop.f32.mrf.mxu0
  %v437 = vadd.f32 0.0, %v436
  %438 = vmatmul.bf16.gmra.mxu0 %v258
  %v439 = vpop.f32.mrf.mxu0
  %v440 = vadd.f32 0.0, %v439
  %v441 = vpop.f32.mrf.mxu0
  %v442 = vadd.f32 0.0, %v441
  %443 = vmatmul.bf16.gmra.mxu0 %v260
  %v444 = vpop.f32.mrf.mxu0
  %v445 = vadd.f32 0.0, %v444
  %v446 = vpop.f32.mrf.mxu0
  %v447 = vadd.f32 0.0, %v446
  %448 = vmatmul.bf16.gmra.mxu0 %v262
  %v449 = vpop.f32.mrf.mxu0
  %v450 = vadd.f32 0.0, %v449
  %v451 = vpop.f32.mrf.mxu0
  %v452 = vadd.f32 0.0, %v451
  %453 = vmatmul.bf16.gmra.mxu0 %v264
  %v454 = vpop.f32.mrf.mxu0
  %v455 = vadd.f32 0.0, %v454
  %v456 = vpop.f32.mrf.mxu0
  %v457 = vadd.f32 0.0, %v456
  %458 = vmatmul.bf16.gmra.mxu0 %v266
  %v459 = vpop.f32.mrf.mxu0
  %v460 = vadd.f32 0.0, %v459
  %v461 = vpop.f32.mrf.mxu0
  %v462 = vadd.f32 0.0, %v461
  %463 = vmatmul.bf16.gmra.mxu0 %v268
  %v464 = vpop.f32.mrf.mxu0
  %v465 = vadd.f32 0.0, %v464
  %v466 = vpop.f32.mrf.mxu0
  %v467 = vadd.f32 0.0, %v466
  %468 = vmatmul.bf16.gmra.mxu0 %v270
  %v469 = vpop.f32.mrf.mxu0
  %v470 = vadd.f32 0.0, %v469
  %v471 = vpop.f32.mrf.mxu0
  %v472 = vadd.f32 0.0, %v471
  %473 = vmatmul.bf16.gmra.mxu0 %v272
  %v474 = vpop.f32.mrf.mxu0
  %v475 = vadd.f32 0.0, %v474
  %v476 = vpop.f32.mrf.mxu0
  %v477 = vadd.f32 0.0, %v476
  %478 = vmatmul.bf16.gmra.mxu0 %v274
  %v479 = vpop.f32.mrf.mxu0
  %v480 = vadd.f32 0.0, %v479
  %v481 = vpop.f32.mrf.mxu0
  %v482 = vadd.f32 0.0, %v481
  %483 = vmatmul.bf16.gmra.mxu0 %v276
  %v484 = vpop.f32.mrf.mxu0
  %v485 = vadd.f32 0.0, %v484
  %v486 = vpop.f32.mrf.mxu0
  %v487 = vadd.f32 0.0, %v486
  %488 = vmatmul.bf16.gmra.mxu0 %v278
  %v489 = vpop.f32.mrf.mxu0
  %v490 = vadd.f32 0.0, %v489
  %v491 = vpop.f32.mrf.mxu0
  %v492 = vadd.f32 0.0, %v491
  %493 = vmatmul.bf16.gmra.mxu0 %v280
  %v494 = vpop.f32.mrf.mxu0
  %v495 = vadd.f32 0.0, %v494
  %v496 = vpop.f32.mrf.mxu0
  %v497 = vadd.f32 0.0, %v496
  %498 = vdwg.mxu0
  %499 = vmatpush.bf16.msra.mxu0 %v393
  %500 = vmatpush.bf16.msra.mxu0 %v392
  %501 = vmatpush.bf16.msra.mxu0 %v391
  %502 = vmatpush.bf16.msra.mxu0 %v390
  %503 = vmatpush.bf16.msra.mxu0 %v389
  %504 = vmatpush.bf16.msra.mxu0 %v388
  %505 = vmatpush.bf16.msra.mxu0 %v387
  %506 = vmatpush.bf16.msra.mxu0 %v386
  %507 = vmatmul.bf16.gmra.mxu0 %v251
  %v508 = vpop.f32.mrf.mxu0
  %v509 = vadd.f32 %v420, %v508
  %v510 = vpop.f32.mrf.mxu0
  %v511 = vadd.f32 %v422, %v510
  %512 = vmatmul.bf16.gmra.mxu0 %v253
  %v513 = vpop.f32.mrf.mxu0
  %v514 = vadd.f32 %v425, %v513
  %v515 = vpop.f32.mrf.mxu0
  %v516 = vadd.f32 %v427, %v515
  %517 = vmatmul.bf16.gmra.mxu0 %v255
  %v518 = vpop.f32.mrf.mxu0
  %v519 = vadd.f32 %v430, %v518
  %v520 = vpop.f32.mrf.mxu0
  %v521 = vadd.f32 %v432, %v520
  %522 = vmatmul.bf16.gmra.mxu0 %v257
  %v523 = vpop.f32.mrf.mxu0
  %v524 = vadd.f32 %v435, %v523
  %v525 = vpop.f32.mrf.mxu0
  %v526 = vadd.f32 %v437, %v525
  %527 = vmatmul.bf16.gmra.mxu0 %v259
  %v528 = vpop.f32.mrf.mxu0
  %v529 = vadd.f32 %v440, %v528
  %v530 = vpop.f32.mrf.mxu0
  %v531 = vadd.f32 %v442, %v530
  %532 = vmatmul.bf16.gmra.mxu0 %v261
  %v533 = vpop.f32.mrf.mxu0
  %v534 = vadd.f32 %v445, %v533
  %v535 = vpop.f32.mrf.mxu0
  %v536 = vadd.f32 %v447, %v535
  %537 = vmatmul.bf16.gmra.mxu0 %v263
  %v538 = vpop.f32.mrf.mxu0
  %v539 = vadd.f32 %v450, %v538
  %v540 = vpop.f32.mrf.mxu0
  %v541 = vadd.f32 %v452, %v540
  %542 = vmatmul.bf16.gmra.mxu0 %v265
  %v543 = vpop.f32.mrf.mxu0
  %v544 = vadd.f32 %v455, %v543
  %v545 = vpop.f32.mrf.mxu0
  %v546 = vadd.f32 %v457, %v545
  %547 = vmatmul.bf16.gmra.mxu0 %v267
  %v548 = vpop.f32.mrf.mxu0
  %v549 = vadd.f32 %v460, %v548
  %v550 = vpop.f32.mrf.mxu0
  %v551 = vadd.f32 %v462, %v550
  %552 = vmatmul.bf16.gmra.mxu0 %v269
  %v553 = vpop.f32.mrf.mxu0
  %v554 = vadd.f32 %v465, %v553
  %v555 = vpop.f32.mrf.mxu0
  %v556 = vadd.f32 %v467, %v555
  %557 = vmatmul.bf16.gmra.mxu0 %v271
  %v558 = vpop.f32.mrf.mxu0
  %v559 = vadd.f32 %v470, %v558
  %v560 = vpop.f32.mrf.mxu0
  %v561 = vadd.f32 %v472, %v560
  %562 = vmatmul.bf16.gmra.mxu0 %v273
  %v563 = vpop.f32.mrf.mxu0
  %v564 = vadd.f32 %v475, %v563
  %v565 = vpop.f32.mrf.mxu0
  %v566 = vadd.f32 %v477, %v565
  %567 = vmatmul.bf16.gmra.mxu0 %v275
  %v568 = vpop.f32.mrf.mxu0
  %v569 = vadd.f32 %v480, %v568
  %v570 = vpop.f32.mrf.mxu0
  %v571 = vadd.f32 %v482, %v570
  %572 = vmatmul.bf16.gmra.mxu0 %v277
  %v573 = vpop.f32.mrf.mxu0
  %v574 = vadd.f32 %v485, %v573
  %v575 = vpop.f32.mrf.mxu0
  %v576 = vadd.f32 %v487, %v575
  %577 = vmatmul.bf16.gmra.mxu0 %v279
  %v578 = vpop.f32.mrf.mxu0
  %v579 = vadd.f32 %v490, %v578
  %v580 = vpop.f32.mrf.mxu0
  %v581 = vadd.f32 %v492, %v580
  %582 = vmatmul.bf16.gmra.mxu0 %v281
  %v583 = vpop.f32.mrf.mxu0
  %v584 = vadd.f32 %v495, %v583
  %v585 = vpop.f32.mrf.mxu0
  %v586 = vadd.f32 %v497, %v585
  %587 = vdwg.mxu0
  %v588 = vadd.f32 %v90, %v509
  %v589 = vadd.f32 %v91, %v511
  %v590 = vadd.f32 %v92, %v514
  %v591 = vadd.f32 %v93, %v516
  %v592 = vadd.f32 %v94, %v519
  %v593 = vadd.f32 %v95, %v521
  %v594 = vadd.f32 %v96, %v524
  %v595 = vadd.f32 %v97, %v526
  %v596 = vadd.f32 %v98, %v529
  %v597 = vadd.f32 %v99, %v531
  %v598 = vadd.f32 %v100, %v534
  %v599 = vadd.f32 %v101, %v536
  %v600 = vadd.f32 %v102, %v539
  %v601 = vadd.f32 %v103, %v541
  %v602 = vadd.f32 %v104, %v544
  %v603 = vadd.f32 %v105, %v546
  %v604 = vadd.f32 %v106, %v549
  %v605 = vadd.f32 %v107, %v551
  %v606 = vadd.f32 %v108, %v554
  %v607 = vadd.f32 %v109, %v556
  %v608 = vadd.f32 %v110, %v559
  %v609 = vadd.f32 %v111, %v561
  %v610 = vadd.f32 %v112, %v564
  %v611 = vadd.f32 %v113, %v566
  %v612 = vadd.f32 %v114, %v569
  %v613 = vadd.f32 %v115, %v571
  %v614 = vadd.f32 %v116, %v574
  %v615 = vadd.f32 %v117, %v576
  %v616 = vadd.f32 %v118, %v579
  %v617 = vadd.f32 %v119, %v581
  %v618 = vadd.f32 %v120, %v584
  %v619 = vadd.f32 %v121, %v586
  %620 = vst [vmem:[#allocation2] sm:$0xff] %v588
  %621 = vst [vmem:[#allocation2 + $0x8] sm:$0xff] %v589
  %622 = vst [vmem:[#allocation2 + $0x10] sm:$0xff] %v590
  %623 = vst [vmem:[#allocation2 + $0x18] sm:$0xff] %v591
  %624 = vst [vmem:[#allocation2 + $0x20] sm:$0xff] %v592
  %625 = vst [vmem:[#allocation2 + $0x28] sm:$0xff] %v593
  %626 = vst [vmem:[#allocation2 + $0x30] sm:$0xff] %v594
  %627 = vst [vmem:[#allocation2 + $0x38] sm:$0xff] %v595
  %628 = vst [vmem:[#allocation2 + $0x40] sm:$0xff] %v596
  %629 = vst [vmem:[#allocation2 + $0x48] sm:$0xff] %v597
  %630 = vst [vmem:[#allocation2 + $0x50] sm:$0xff] %v598
  %631 = vst [vmem:[#allocation2 + $0x58] sm:$0xff] %v599
  %632 = vst [vmem:[#allocation2 + $0x60] sm:$0xff] %v600
  %633 = vst [vmem:[#allocation2 + $0x68] sm:$0xff] %v601
  %634 = vst [vmem:[#allocation2 + $0x70] sm:$0xff] %v602
  %635 = vst [vmem:[#allocation2 + $0x78] sm:$0xff] %v603
  %636 = vst [vmem:[#allocation2 + $0x80] sm:$0xff] %v604
  %637 = vst [vmem:[#allocation2 + $0x88] sm:$0xff] %v605
  %638 = vst [vmem:[#allocation2 + $0x90] sm:$0xff] %v606
  %639 = vst [vmem:[#allocation2 + $0x98] sm:$0xff] %v607
  %640 = vst [vmem:[#allocation2 + $0xa0] sm:$0xff] %v608
  %641 = vst [vmem:[#allocation2 + $0xa8] sm:$0xff] %v609
  %642 = vst [vmem:[#allocation2 + $0xb0] sm:$0xff] %v610
  %643 = vst [vmem:[#allocation2 + $0xb8] sm:$0xff] %v611
  %644 = vst [vmem:[#allocation2 + $0xc0] sm:$0xff] %v612
  %645 = vst [vmem:[#allocation2 + $0xc8] sm:$0xff] %v613
  %646 = vst [vmem:[#allocation2 + $0xd0] sm:$0xff] %v614
  %647 = vst [vmem:[#allocation2 + $0xd8] sm:$0xff] %v615
  %648 = vst [vmem:[#allocation2 + $0xe0] sm:$0xff] %v616
  %649 = vst [vmem:[#allocation2 + $0xe8] sm:$0xff] %v617
  %650 = vst [vmem:[#allocation2 + $0xf0] sm:$0xff] %v618
  %651 = vst [vmem:[#allocation2 + $0xf8] sm:$0xff] %v619
  // Predicated region
  $region22: #{gnn_forward.5} parent=0 // pred_check
    %p652 = pneg %p17
  $region23: #{gnn_forward.5} parent=0 // pred_check_branch
    %654 = sbr.rel (%p652) target = $region25
  $region24: #{gnn_forward.5} parent=0 // pred_region
    %v655 = vld [vmem:[#allocation2] sm:$0xff]
    %v656 = vld [vmem:[#allocation2 + $0x8] sm:$0xff]
    %v657 = vld [vmem:[#allocation2 + $0x10] sm:$0xff]
    %v658 = vld [vmem:[#allocation2 + $0x18] sm:$0xff]
    %v659 = vld [vmem:[#allocation2 + $0x20] sm:$0xff]
    %v660 = vld [vmem:[#allocation2 + $0x28] sm:$0xff]
    %v661 = vld [vmem:[#allocation2 + $0x30] sm:$0xff]
    %v662 = vld [vmem:[#allocation2 + $0x38] sm:$0xff]
    %v663 = vld [vmem:[#allocation2 + $0x40] sm:$0xff]
    %v664 = vld [vmem:[#allocation2 + $0x48] sm:$0xff]
    %v665 = vld [vmem:[#allocation2 + $0x50] sm:$0xff]
    %v666 = vld [vmem:[#allocation2 + $0x58] sm:$0xff]
    %v667 = vld [vmem:[#allocation2 + $0x60] sm:$0xff]
    %v668 = vld [vmem:[#allocation2 + $0x68] sm:$0xff]
    %v669 = vld [vmem:[#allocation2 + $0x70] sm:$0xff]
    %v670 = vld [vmem:[#allocation2 + $0x78] sm:$0xff]
    %v671 = vld [vmem:[#allocation2 + $0x80] sm:$0xff]
    %v672 = vld [vmem:[#allocation2 + $0x88] sm:$0xff]
    %v673 = vld [vmem:[#allocation2 + $0x90] sm:$0xff]
    %v674 = vld [vmem:[#allocation2 + $0x98] sm:$0xff]
    %v675 = vld [vmem:[#allocation2 + $0xa0] sm:$0xff]
    %v676 = vld [vmem:[#allocation2 + $0xa8] sm:$0xff]
    %v677 = vld [vmem:[#allocation2 + $0xb0] sm:$0xff]
    %v678 = vld [vmem:[#allocation2 + $0xb8] sm:$0xff]
    %v679 = vld [vmem:[#allocation2 + $0xc0] sm:$0xff]
    %v680 = vld [vmem:[#allocation2 + $0xc8] sm:$0xff]
    %v681 = vld [vmem:[#allocation2 + $0xd0] sm:$0xff]
    %v682 = vld [vmem:[#allocation2 + $0xd8] sm:$0xff]
    %v683 = vld [vmem:[#allocation2 + $0xe0] sm:$0xff]
    %v684 = vld [vmem:[#allocation2 + $0xe8] sm:$0xff]
    %v685 = vld [vmem:[#allocation2 + $0xf0] sm:$0xff]
    %v686 = vld [vmem:[#allocation2 + $0xf8] sm:$0xff]
    %v687 = vld [vmem:[%s2] sm:$0x1]
    %v689 = vperm.slane %v687, 0
    %v691 = vadd.f32 %v655, %v689
    %v692 = vadd.f32 %v656, %v689
    %v693 = vadd.f32 %v657, %v689
    %v694 = vadd.f32 %v658, %v689
    %v695 = vadd.f32 %v659, %v689
    %v696 = vadd.f32 %v660, %v689
    %v697 = vadd.f32 %v661, %v689
    %v698 = vadd.f32 %v662, %v689
    %v699 = vadd.f32 %v663, %v689
    %v700 = vadd.f32 %v664, %v689
    %v701 = vadd.f32 %v665, %v689
    %v702 = vadd.f32 %v666, %v689
    %v703 = vadd.f32 %v667, %v689
    %v704 = vadd.f32 %v668, %v689
    %v705 = vadd.f32 %v669, %v689
    %v706 = vadd.f32 %v670, %v689
    %v707 = vadd.f32 %v671, %v689
    %v708 = vadd.f32 %v672, %v689
    %v709 = vadd.f32 %v673, %v689
    %v710 = vadd.f32 %v674, %v689
    %v711 = vadd.f32 %v675, %v689
    %v712 = vadd.f32 %v676, %v689
    %v713 = vadd.f32 %v677, %v689
    %v714 = vadd.f32 %v678, %v689
    %v715 = vadd.f32 %v679, %v689
    %v716 = vadd.f32 %v680, %v689
    %v717 = vadd.f32 %v681, %v689
    %v718 = vadd.f32 %v682, %v689
    %v719 = vadd.f32 %v683, %v689
    %v720 = vadd.f32 %v684, %v689
    %v721 = vadd.f32 %v685, %v689
    %v722 = vadd.f32 %v686, %v689
    %v723 = vmax.f32 %v691, 0.0
    %v724 = vmax.f32 %v692, 0.0
    %v725 = vmax.f32 %v693, 0.0
    %v726 = vmax.f32 %v694, 0.0
    %v727 = vmax.f32 %v695, 0.0
    %v728 = vmax.f32 %v696, 0.0
    %v729 = vmax.f32 %v697, 0.0
    %v730 = vmax.f32 %v698, 0.0
    %v731 = vmax.f32 %v699, 0.0
    %v732 = vmax.f32 %v700, 0.0
    %v733 = vmax.f32 %v701, 0.0
    %v734 = vmax.f32 %v702, 0.0
    %v735 = vmax.f32 %v703, 0.0
    %v736 = vmax.f32 %v704, 0.0
    %v737 = vmax.f32 %v705, 0.0
    %v738 = vmax.f32 %v706, 0.0
    %v739 = vmax.f32 %v707, 0.0
    %v740 = vmax.f32 %v708, 0.0
    %v741 = vmax.f32 %v709, 0.0
    %v742 = vmax.f32 %v710, 0.0
    %v743 = vmax.f32 %v711, 0.0
    %v744 = vmax.f32 %v712, 0.0
    %v745 = vmax.f32 %v713, 0.0
    %v746 = vmax.f32 %v714, 0.0
    %v747 = vmax.f32 %v715, 0.0
    %v748 = vmax.f32 %v716, 0.0
    %v749 = vmax.f32 %v717, 0.0
    %v750 = vmax.f32 %v718, 0.0
    %v751 = vmax.f32 %v719, 0.0
    %v752 = vmax.f32 %v720, 0.0
    %v753 = vmax.f32 %v721, 0.0
    %v754 = vmax.f32 %v722, 0.0
    %v755 = vpack.c.bf16 %v724, %v723
    %v756 = vpack.c.bf16 %v726, %v725
    %v757 = vpack.c.bf16 %v728, %v727
    %v758 = vpack.c.bf16 %v730, %v729
    %v759 = vpack.c.bf16 %v732, %v731
    %v760 = vpack.c.bf16 %v734, %v733
    %v761 = vpack.c.bf16 %v736, %v735
    %v762 = vpack.c.bf16 %v738, %v737
    %v763 = vpack.c.bf16 %v740, %v739
    %v764 = vpack.c.bf16 %v742, %v741
    %v765 = vpack.c.bf16 %v744, %v743
    %v766 = vpack.c.bf16 %v746, %v745
    %v767 = vpack.c.bf16 %v748, %v747
    %v768 = vpack.c.bf16 %v750, %v749
    %v769 = vpack.c.bf16 %v752, %v751
    %v770 = vpack.c.bf16 %v754, %v753
    %v771 = vld [vmem:[%s3] sm:$0xf]
    %v772 = vld [vmem:[%s3 + $0x4] sm:$0xf]
    %v773 = vld [vmem:[%s3 + $0x8] sm:$0xf]
    %v774 = vld [vmem:[%s3 + $0xc] sm:$0xf]
    %v775 = vld [vmem:[%s3 + $0x10] sm:$0xf]
    %v776 = vld [vmem:[%s3 + $0x14] sm:$0xf]
    %v777 = vld [vmem:[%s3 + $0x18] sm:$0xf]
    %v778 = vld [vmem:[%s3 + $0x1c] sm:$0xf]
    %v779 = vld [vmem:[%s3 + $0x20] sm:$0xf]
    %v780 = vld [vmem:[%s3 + $0x24] sm:$0xf]
    %v781 = vld [vmem:[%s3 + $0x28] sm:$0xf]
    %v782 = vld [vmem:[%s3 + $0x2c] sm:$0xf]
    %v783 = vld [vmem:[%s3 + $0x30] sm:$0xf]
    %v784 = vld [vmem:[%s3 + $0x34] sm:$0xf]
    %v785 = vld [vmem:[%s3 + $0x38] sm:$0xf]
    %v786 = vld [vmem:[%s3 + $0x3c] sm:$0xf]
    %v803 = vunpack.c.l.b16 %v771
    %v804 = vunpack.c.l.b16 %v772
    %v805 = vunpack.c.l.b16 %v773
    %v806 = vunpack.c.l.b16 %v774
    %v807 = vunpack.c.l.b16 %v775
    %v808 = vunpack.c.l.b16 %v776
    %v809 = vunpack.c.l.b16 %v777
    %v810 = vunpack.c.l.b16 %v778
    %v811 = vunpack.c.l.b16 %v779
    %v812 = vunpack.c.l.b16 %v780
    %v813 = vunpack.c.l.b16 %v781
    %v814 = vunpack.c.l.b16 %v782
    %v815 = vunpack.c.l.b16 %v783
    %v816 = vunpack.c.l.b16 %v784
    %v817 = vunpack.c.l.b16 %v785
    %v818 = vunpack.c.l.b16 %v786
    %v819 = vpack.c.b16 %v804, %v803
    %v820 = vpack.c.b16 %v806, %v805
    %v821 = vpack.c.b16 %v808, %v807
    %v822 = vpack.c.b16 %v810, %v809
    %v823 = vpack.c.b16 %v812, %v811
    %v824 = vpack.c.b16 %v814, %v813
    %v825 = vpack.c.b16 %v816, %v815
    %v826 = vpack.c.b16 %v818, %v817
    %835 = vmatpush.bf16.msra.mxu0 %v826
    %836 = vmatpush.bf16.msra.mxu0 %v825
    %837 = vmatpush.bf16.msra.mxu0 %v824
    %838 = vmatpush.bf16.msra.mxu0 %v823
    %839 = vmatpush.bf16.msra.mxu0 %v822
    %840 = vmatpush.bf16.msra.mxu0 %v821
    %841 = vmatpush.bf16.msra.mxu0 %v820
    %842 = vmatpush.bf16.msra.mxu0 %v819
    %843 = vmatmul.bf16.gmra.mxu0 %v755
    %v844 = vpop.f32.mrf.mxu0
    %v845 = vadd.f32 0.0, %v844
    %v846 = vpop.f32.mrf.mxu0
    %v847 = vadd.f32 0.0, %v846
    %848 = vmatmul.bf16.gmra.mxu0 %v756
    %v849 = vpop.f32.mrf.mxu0
    %v850 = vadd.f32 0.0, %v849
    %v851 = vpop.f32.mrf.mxu0
    %v852 = vadd.f32 0.0, %v851
    %853 = vmatmul.bf16.gmra.mxu0 %v757
    %v854 = vpop.f32.mrf.mxu0
    %v855 = vadd.f32 0.0, %v854
    %v856 = vpop.f32.mrf.mxu0
    %v857 = vadd.f32 0.0, %v856
    %858 = vmatmul.bf16.gmra.mxu0 %v758
    %v859 = vpop.f32.mrf.mxu0
    %v860 = vadd.f32 0.0, %v859
    %v861 = vpop.f32.mrf.mxu0
    %v862 = vadd.f32 0.0, %v861
    %863 = vmatmul.bf16.gmra.mxu0 %v759
    %v864 = vpop.f32.mrf.mxu0
    %v865 = vadd.f32 0.0, %v864
    %v866 = vpop.f32.mrf.mxu0
    %v867 = vadd.f32 0.0, %v866
    %868 = vmatmul.bf16.gmra.mxu0 %v760
    %v869 = vpop.f32.mrf.mxu0
    %v870 = vadd.f32 0.0, %v869
    %v871 = vpop.f32.mrf.mxu0
    %v872 = vadd.f32 0.0, %v871
    %873 = vmatmul.bf16.gmra.mxu0 %v761
    %v874 = vpop.f32.mrf.mxu0
    %v875 = vadd.f32 0.0, %v874
    %v876 = vpop.f32.mrf.mxu0
    %v877 = vadd.f32 0.0, %v876
    %878 = vmatmul.bf16.gmra.mxu0 %v762
    %v879 = vpop.f32.mrf.mxu0
    %v880 = vadd.f32 0.0, %v879
    %v881 = vpop.f32.mrf.mxu0
    %v882 = vadd.f32 0.0, %v881
    %883 = vmatmul.bf16.gmra.mxu0 %v763
    %v884 = vpop.f32.mrf.mxu0
    %v885 = vadd.f32 0.0, %v884
    %v886 = vpop.f32.mrf.mxu0
    %v887 = vadd.f32 0.0, %v886
    %888 = vmatmul.bf16.gmra.mxu0 %v764
    %v889 = vpop.f32.mrf.mxu0
    %v890 = vadd.f32 0.0, %v889
    %v891 = vpop.f32.mrf.mxu0
    %v892 = vadd.f32 0.0, %v891
    %893 = vmatmul.bf16.gmra.mxu0 %v765
    %v894 = vpop.f32.mrf.mxu0
    %v895 = vadd.f32 0.0, %v894
    %v896 = vpop.f32.mrf.mxu0
    %v897 = vadd.f32 0.0, %v896
    %898 = vmatmul.bf16.gmra.mxu0 %v766
    %v899 = vpop.f32.mrf.mxu0
    %v900 = vadd.f32 0.0, %v899
    %v901 = vpop.f32.mrf.mxu0
    %v902 = vadd.f32 0.0, %v901
    %903 = vmatmul.bf16.gmra.mxu0 %v767
    %v904 = vpop.f32.mrf.mxu0
    %v905 = vadd.f32 0.0, %v904
    %v906 = vpop.f32.mrf.mxu0
    %v907 = vadd.f32 0.0, %v906
    %908 = vmatmul.bf16.gmra.mxu0 %v768
    %v909 = vpop.f32.mrf.mxu0
    %v910 = vadd.f32 0.0, %v909
    %v911 = vpop.f32.mrf.mxu0
    %v912 = vadd.f32 0.0, %v911
    %913 = vmatmul.bf16.gmra.mxu0 %v769
    %v914 = vpop.f32.mrf.mxu0
    %v915 = vadd.f32 0.0, %v914
    %v916 = vpop.f32.mrf.mxu0
    %v917 = vadd.f32 0.0, %v916
    %918 = vmatmul.bf16.gmra.mxu0 %v770
    %v919 = vpop.f32.mrf.mxu0
    %v920 = vadd.f32 0.0, %v919
    %v921 = vpop.f32.mrf.mxu0
    %v922 = vadd.f32 0.0, %v921
    %923 = vdwg.mxu0
    %v924 = vpack.c.bf16 %v845, %v845
    %v925 = vpack.c.bf16 %v847, %v847
    %v926 = vpack.c.bf16 %v850, %v850
    %v927 = vpack.c.bf16 %v852, %v852
    %v928 = vpack.c.bf16 %v855, %v855
    %v929 = vpack.c.bf16 %v857, %v857
    %v930 = vpack.c.bf16 %v860, %v860
    %v931 = vpack.c.bf16 %v862, %v862
    %v932 = vpack.c.bf16 %v865, %v865
    %v933 = vpack.c.bf16 %v867, %v867
    %v934 = vpack.c.bf16 %v870, %v870
    %v935 = vpack.c.bf16 %v872, %v872
    %v936 = vpack.c.bf16 %v875, %v875
    %v937 = vpack.c.bf16 %v877, %v877
    %v938 = vpack.c.bf16 %v880, %v880
    %v939 = vpack.c.bf16 %v882, %v882
    %v940 = vpack.c.bf16 %v885, %v885
    %v941 = vpack.c.bf16 %v887, %v887
    %v942 = vpack.c.bf16 %v890, %v890
    %v943 = vpack.c.bf16 %v892, %v892
    %v944 = vpack.c.bf16 %v895, %v895
    %v945 = vpack.c.bf16 %v897, %v897
    %v946 = vpack.c.bf16 %v900, %v900
    %v947 = vpack.c.bf16 %v902, %v902
    %v948 = vpack.c.bf16 %v905, %v905
    %v949 = vpack.c.bf16 %v907, %v907
    %v950 = vpack.c.bf16 %v910, %v910
    %v951 = vpack.c.bf16 %v912, %v912
    %v952 = vpack.c.bf16 %v915, %v915
    %v953 = vpack.c.bf16 %v917, %v917
    %v954 = vpack.c.bf16 %v920, %v920
    %v955 = vpack.c.bf16 %v922, %v922
    %956 = vst [vmem:[%s4] sm:$0xf] %v924
    %957 = vst [vmem:[%s4 + $0x4] sm:$0xf] %v925
    %958 = vst [vmem:[%s4 + $0x8] sm:$0xf] %v926
    %959 = vst [vmem:[%s4 + $0xc] sm:$0xf] %v927
    %960 = vst [vmem:[%s4 + $0x10] sm:$0xf] %v928
    %961 = vst [vmem:[%s4 + $0x14] sm:$0xf] %v929
    %962 = vst [vmem:[%s4 + $0x18] sm:$0xf] %v930
    %963 = vst [vmem:[%s4 + $0x1c] sm:$0xf] %v931
    %964 = vst [vmem:[%s4 + $0x20] sm:$0xf] %v932
    %965 = vst [vmem:[%s4 + $0x24] sm:$0xf] %v933
    %966 = vst [vmem:[%s4 + $0x28] sm:$0xf] %v934
    %967 = vst [vmem:[%s4 + $0x2c] sm:$0xf] %v935
    %968 = vst [vmem:[%s4 + $0x30] sm:$0xf] %v936
    %969 = vst [vmem:[%s4 + $0x34] sm:$0xf] %v937
    %970 = vst [vmem:[%s4 + $0x38] sm:$0xf] %v938
    %971 = vst [vmem:[%s4 + $0x3c] sm:$0xf] %v939
    %972 = vst [vmem:[%s4 + $0x40] sm:$0xf] %v940
    %973 = vst [vmem:[%s4 + $0x44] sm:$0xf] %v941
    %974 = vst [vmem:[%s4 + $0x48] sm:$0xf] %v942
    %975 = vst [vmem:[%s4 + $0x4c] sm:$0xf] %v943
    %976 = vst [vmem:[%s4 + $0x50] sm:$0xf] %v944
    %977 = vst [vmem:[%s4 + $0x54] sm:$0xf] %v945
    %978 = vst [vmem:[%s4 + $0x58] sm:$0xf] %v946
    %979 = vst [vmem:[%s4 + $0x5c] sm:$0xf] %v947
    %980 = vst [vmem:[%s4 + $0x60] sm:$0xf] %v948
    %981 = vst [vmem:[%s4 + $0x64] sm:$0xf] %v949
    %982 = vst [vmem:[%s4 + $0x68] sm:$0xf] %v950
    %983 = vst [vmem:[%s4 + $0x6c] sm:$0xf] %v951
    %984 = vst [vmem:[%s4 + $0x70] sm:$0xf] %v952
    %985 = vst [vmem:[%s4 + $0x74] sm:$0xf] %v953
    %986 = vst [vmem:[%s4 + $0x78] sm:$0xf] %v954
    %987 = vst [vmem:[%s4 + $0x7c] sm:$0xf] %v955
  $region25: #{gnn_forward.5} parent=0 // pred_fallthru
    _
  // Predicated region
  $region26: #{gnn_forward.5} parent=0 // pred_check
    _
  $region27: #{gnn_forward.5} parent=0 // pred_check_branch
    %989 = sbr.rel (0) target = $region29
  $region28: #{gnn_forward.5} parent=0 // pred_region
    _
  $region29: #{gnn_forward.5} parent=0 // pred_fallthru
    _
  // Predicated region
  $region30: #{gnn_forward.5} parent=0 // pred_check
    _
  $region31: #{gnn_forward.5} parent=0 // pred_check_branch
    %991 = sbr.rel (0) target = $region33
  $region32: #{gnn_forward.5} parent=0 // pred_region
    _
  $region33: #{gnn_forward.5} parent=0 // pred_fallthru
    _

</llo_original>
